<compile_context>
chip_gen: v7x
topology: tpu7x:2x2x1
jax: 0.10.0
libtpu: 0.0.40
codegen_flags: <defaults>
</compile_context>

<pallas_src>
import functools
import math

import jax
import jax.numpy as jnp
import numpy as np
from jax.experimental import pallas as pl
from jax.experimental.pallas import tpu as pltpu

LN_EPS = 1e-5                       # matches nn.LayerNorm default
COMPUTE_DTYPE = jnp.bfloat16        # MXU operand dtype (f32 accumulation)


def _layer_norm(x, gamma, beta):
    # f32 elementwise math (eps inside rsqrt) — matches nn.LayerNorm.
    mean = jnp.mean(x, axis=-1, keepdims=True)
    var = jnp.mean((x - mean) ** 2, axis=-1, keepdims=True)
    inv = jax.lax.rsqrt(var + LN_EPS)
    return (x - mean) * inv * gamma + beta


def encoder_layer_kernel(xq_ref, xkv_ref, mbias_ref,
                         wq_ref, bq_ref, wk_ref, bk_ref, wv_ref, bv_ref,
                         wo_ref, bo_ref,
                         g0_ref, be0_ref,
                         w1_ref, b1_ref, w2_ref, b2_ref,
                         g1_ref, be1_ref,
                         o_ref, *, num_heads):
    f32 = jnp.float32
    cd = COMPUTE_DTYPE

    xq = xq_ref[0].astype(f32)          # (TQ, C)  query rows of this tile
    xkv = xkv_ref[0].astype(f32)        # (T,  C)  full sequence for this batch
    TQ, C = xq.shape
    T = xkv.shape[0]
    H = num_heads
    Dh = C // H

    xq_c = xq.astype(cd)
    xkv_c = xkv.astype(cd)

    # ---------- fused whole-C projections (scale already folded into Wq) ----------
    q = jnp.dot(xq_c, wq_ref[...], preferred_element_type=f32) + bq_ref[...]   # (TQ, C)
    k = jnp.dot(xkv_c, wk_ref[...], preferred_element_type=f32) + bk_ref[...]  # (T,  C)
    v = jnp.dot(xkv_c, wv_ref[...], preferred_element_type=f32) + bv_ref[...]  # (T,  C)

    qh = jnp.transpose(q.reshape(TQ, H, Dh), (1, 0, 2)).astype(cd)   # (H, TQ, Dh)
    kh = jnp.transpose(k.reshape(T, H, Dh), (1, 0, 2)).astype(cd)    # (H, T,  Dh)
    vh = jnp.transpose(v.reshape(T, H, Dh), (1, 0, 2)).astype(cd)    # (H, T,  Dh)

    # ---------- attention (scores bounded to (H, TQ, T) per grid step) ----------
    # TODO(synk): stream keys with an online-softmax (flash) loop for very long T.
    s = jnp.einsum('hqd,hkd->hqk', qh, kh, preferred_element_type=f32)  # (H, TQ, T)
    s = s + mbias_ref[...]                       # additive mask bias in f32, (1,1,T)
    s = s - jnp.max(s, axis=-1, keepdims=True)
    p = jnp.exp(s)
    denom = jnp.sum(p, axis=-1, keepdims=True)
    p = p * pl.reciprocal(denom, approx=True)    # EUP reciprocal (free slot)

    ctx = jnp.einsum('hqk,hkd->hqd', p.astype(cd), vh,
                     preferred_element_type=f32)                       # (H, TQ, Dh)
    ctx = jnp.transpose(ctx, (1, 0, 2)).reshape(TQ, C)

    attn = jnp.dot(ctx.astype(cd), wo_ref[...],
                   preferred_element_type=f32) + bo_ref[...]           # (TQ, C)

    # dropout is identity at inference time (training=False)
    y = xq + attn                                       # residual add
    y = _layer_norm(y, g0_ref[...], be0_ref[...])       # post-norm #0

    # ---------- feed-forward (hidden bounded to (TQ, F) per tile) ----------
    h = jnp.dot(y.astype(cd), w1_ref[...], preferred_element_type=f32) + b1_ref[...]
    h = jnp.maximum(h, 0.0)                             # relu(fc1)
    z = jnp.dot(h.astype(cd), w2_ref[...], preferred_element_type=f32) + b2_ref[...]
    y = _layer_norm(y + z, g1_ref[...], be1_ref[...])   # residual + post-norm #1

    o_ref[0] = y.astype(o_ref.dtype)


def transformer_encoder_layer(x_tbc, key_padding_mask, params, num_heads):
    """x_tbc: (T, B, C) float32. key_padding_mask: (B, T) float32 (1.0 = pad)."""
    (wq, bq, wk, bk, wv, bv, wo, bo, g0, be0,
     w1, b1, w2, b2, g1, be1) = params

    x = jnp.transpose(x_tbc, (1, 0, 2))          # (B, T, C)
    B, T, C = x.shape
    F = w1.shape[1]

    # Query-row tile.  For real shapes pick 128 (or larger) multiples; the
    # last dim C should also be a multiple of 128 for lane-dense stores.
    TILE_T = T if T <= 128 else 128
    assert T % TILE_T == 0, "demo wrapper requires T % TILE_T == 0"
    grid = (B, T // TILE_T)

    # Additive mask bias, computed once in f32 (not per head / per tile).
    mbias = jnp.where(key_padding_mask > 0.5, -1e30, 0.0).astype(jnp.float32)
    mbias = mbias.reshape(B, 1, T)

    bcast = lambda b, q: (0, 0)                  # weights: DMA'd once, reused every step
    w_spec = lambda shape: pl.BlockSpec(shape, bcast)

    in_specs = [
        pl.BlockSpec((1, TILE_T, C), lambda b, q: (b, q, 0)),   # x (query rows)
        pl.BlockSpec((1, T, C), lambda b, q: (b, 0, 0)),        # x (keys/values, full T)
        pl.BlockSpec((1, 1, T), lambda b, q: (b, 0, 0)),        # mask bias
        w_spec((C, C)), w_spec((1, C)),     # Wq (scale folded), bq
        w_spec((C, C)), w_spec((1, C)),     # Wk, bk
        w_spec((C, C)), w_spec((1, C)),     # Wv, bv
        w_spec((C, C)), w_spec((1, C)),     # Wo, bo
        w_spec((1, C)), w_spec((1, C)),     # LN0 gamma, beta
        w_spec((C, F)), w_spec((1, F)),     # fc1 W, b
        w_spec((F, C)), w_spec((1, C)),     # fc2 W, b
        w_spec((1, C)), w_spec((1, C)),     # LN1 gamma, beta
    ]

    kernel = functools.partial(encoder_layer_kernel, num_heads=num_heads)
    out = pl.pallas_call(
        kernel,
        out_shape=jax.ShapeDtypeStruct((B, T, C), x.dtype),
        grid=grid,
        in_specs=in_specs,
        out_specs=pl.BlockSpec((1, TILE_T, C), lambda b, q: (b, q, 0)),
        compiler_params=pltpu.CompilerParams(
            dimension_semantics=("parallel", "parallel"),   # megacore sharding on v7x
            vmem_limit_bytes=64 * 1024 * 1024,              # sized for v7x's 64 MiB VMEM
        ),
    )(x, x, mbias, *params)
    return jnp.transpose(out, (1, 0, 2))         # back to (T, B, C)


# ---------------- deterministic parameter construction ----------------

def xavier_uniform(key, shape, fan_in, fan_out):
    bound = math.sqrt(6.0 / (fan_in + fan_out))
    return jax.random.uniform(key, shape, jnp.float32, -bound, bound)


def make_params(key, C, H, F):
    """fairseq-style init, repacked lane-dense: (C, C)/(C, F) matmul weights in
    COMPUTE_DTYPE, biases/LN params in f32, 1/sqrt(Dh) folded into Wq."""
    Dh = C // H
    scale = 1.0 / math.sqrt(Dh)
    keys = jax.random.split(key, 4)

    # MultiheadAttention in_proj_weight (3C, C), xavier; biases 0.
    in_proj_w = xavier_uniform(keys[0], (3 * C, C), fan_in=C, fan_out=3 * C)
    wq_pt, wk_pt, wv_pt = in_proj_w[:C], in_proj_w[C:2 * C], in_proj_w[2 * C:]

    # torch Linear computes y = x @ W.T + b  ->  JAX weight is W.T (in, out).
    wq = (wq_pt.T * scale).astype(COMPUTE_DTYPE)      # scale folded (bias is zero)
    wk = wk_pt.T.astype(COMPUTE_DTYPE)
    wv = wv_pt.T.astype(COMPUTE_DTYPE)
    bq = jnp.zeros((1, C), jnp.float32)
    bk = jnp.zeros((1, C), jnp.float32)
    bv = jnp.zeros((1, C), jnp.float32)

    wo_pt = xavier_uniform(keys[1], (C, C), fan_in=C, fan_out=C)      # out_proj
    wo = wo_pt.T.astype(COMPUTE_DTYPE)
    bo = jnp.zeros((1, C), jnp.float32)

    g0 = jnp.ones((1, C), jnp.float32)
    be0 = jnp.zeros((1, C), jnp.float32)

    w1_pt = xavier_uniform(keys[2], (F, C), fan_in=C, fan_out=F)      # fc1
    w1 = w1_pt.T.astype(COMPUTE_DTYPE)
    b1 = jnp.zeros((1, F), jnp.float32)
    w2_pt = xavier_uniform(keys[3], (C, F), fan_in=F, fan_out=C)      # fc2
    w2 = w2_pt.T.astype(COMPUTE_DTYPE)
    b2 = jnp.zeros((1, C), jnp.float32)

    g1 = jnp.ones((1, C), jnp.float32)
    be1 = jnp.zeros((1, C), jnp.float32)

    return [wq, bq, wk, bk, wv, bv, wo, bo, g0, be0, w1, b1, w2, b2, g1, be1]


# ------------- pure-JAX reference (same math/dtypes, no Pallas) -------------

def ref_forward(x_tbc, key_padding_mask, params, num_heads):
    (wq, bq, wk, bk, wv, bv, wo, bo, g0, be0,
     w1, b1, w2, b2, g1, be1) = params
    f32, cd = jnp.float32, COMPUTE_DTYPE
    x = jnp.transpose(x_tbc, (1, 0, 2)).astype(f32)    # (B, T, C)
    B, T, C = x.shape
    H = num_heads
    Dh = C // H

    xc = x.astype(cd)
    q = jnp.einsum('btc,cf->btf', xc, wq, preferred_element_type=f32) + bq
    k = jnp.einsum('btc,cf->btf', xc, wk, preferred_element_type=f32) + bk
    v = jnp.einsum('btc,cf->btf', xc, wv, preferred_element_type=f32) + bv
    qh = q.reshape(B, T, H, Dh)
    kh = k.reshape(B, T, H, Dh)
    vh = v.reshape(B, T, H, Dh)

    s = jnp.einsum('bqhd,bkhd->bhqk', qh.astype(cd), kh.astype(cd),
                   preferred_element_type=f32)
    mbias = jnp.where(key_padding_mask > 0.5, -1e30, 0.0).astype(f32)
    s = s + mbias[:, None, None, :]
    p = jax.nn.softmax(s, axis=-1)
    ctx = jnp.einsum('bhqk,bkhd->bqhd', p.astype(cd), vh.astype(cd),
                     preferred_element_type=f32).reshape(B, T, C)
    attn = jnp.einsum('btc,cf->btf', ctx.astype(cd), wo,
                      preferred_element_type=f32) + bo

    y = _layer_norm(x + attn, g0, be0)
    h = jnp.maximum(jnp.einsum('btc,cf->btf', y.astype(cd), w1,
                               preferred_element_type=f32) + b1, 0.0)
    z = jnp.einsum('btf,fc->btc', h.astype(cd), w2,
                   preferred_element_type=f32) + b2
    y = _layer_norm(y + z, g1, be1)
    return jnp.transpose(y, (1, 0, 2))


if __name__ == "__main__":
    T, B, C, H, F = 8, 2, 32, 4, 64   # seq, batch, embed_dim, heads, ffn_dim

    key = jax.random.PRNGKey(0)
    k_x, k_p = jax.random.split(key)
    x = jax.random.normal(k_x, (T, B, C), jnp.float32)      # fairseq layout (T, B, C)

    # encoder_padding_mask: (B, T), 1.0 where key is padding.
    # Note: rows where every key is padded degenerate to a uniform softmax
    # (same behavior as before); acceptable since such rows are never consumed.
    mask = np.zeros((B, T), np.float32)
    mask[1, -2:] = 1.0
    mask = jnp.asarray(mask)

    params = make_params(k_p, C, H, F)

    out = transformer_encoder_layer(x, mask, params, num_heads=H)
    out = jax.block_until_ready(out)

    ref = ref_forward(x, mask, params, num_heads=H)
    assert out.shape == (T, B, C)
    np.testing.assert_allclose(np.asarray(out), np.asarray(ref), atol=5e-3, rtol=5e-3)

    print("KERNEL_OK")
</pallas_src>

<mosaic_0001>
module attributes {stable_mosaic.version = 11 : i64} {
  func.func @encoder_layer_kernel(%arg0: i32, %arg1: i32, %arg2: memref<1x8x32xf32, #tpu.memory_space<vmem>>, %arg3: memref<1x8x32xf32, #tpu.memory_space<vmem>>, %arg4: memref<1x1x8xf32, #tpu.memory_space<vmem>>, %arg5: memref<32x32xbf16, #tpu.memory_space<vmem>>, %arg6: memref<1x32xf32, #tpu.memory_space<vmem>>, %arg7: memref<32x32xbf16, #tpu.memory_space<vmem>>, %arg8: memref<1x32xf32, #tpu.memory_space<vmem>>, %arg9: memref<32x32xbf16, #tpu.memory_space<vmem>>, %arg10: memref<1x32xf32, #tpu.memory_space<vmem>>, %arg11: memref<32x32xbf16, #tpu.memory_space<vmem>>, %arg12: memref<1x32xf32, #tpu.memory_space<vmem>>, %arg13: memref<1x32xf32, #tpu.memory_space<vmem>>, %arg14: memref<1x32xf32, #tpu.memory_space<vmem>>, %arg15: memref<32x64xbf16, #tpu.memory_space<vmem>>, %arg16: memref<1x64xf32, #tpu.memory_space<vmem>>, %arg17: memref<64x32xbf16, #tpu.memory_space<vmem>>, %arg18: memref<1x32xf32, #tpu.memory_space<vmem>>, %arg19: memref<1x32xf32, #tpu.memory_space<vmem>>, %arg20: memref<1x32xf32, #tpu.memory_space<vmem>>, %arg21: memref<1x8x32xf32, #tpu.memory_space<vmem>>) attributes {dimension_semantics = [#tpu.dimension_semantics<parallel>, #tpu.dimension_semantics<parallel>], iteration_bounds = array<i64: 2, 1>, scalar_prefetch = 0 : i64, scratch_operands = 0 : i64, tpu.core_type = #tpu.core_type<tc>, window_params = [{transform_indices = @transform_0, window_bounds = array<i64: 1, 8, 32>}, {transform_indices = @transform_1, window_bounds = array<i64: 1, 8, 32>}, {transform_indices = @transform_2, window_bounds = array<i64: 1, 1, 8>}, {pipeline_mode = #tpu.pipeline_mode<synchronous>, transform_indices = @transform_3, window_bounds = array<i64: 32, 32>}, {pipeline_mode = #tpu.pipeline_mode<synchronous>, transform_indices = @transform_4, window_bounds = array<i64: 1, 32>}, {pipeline_mode = #tpu.pipeline_mode<synchronous>, transform_indices = @transform_5, window_bounds = array<i64: 32, 32>}, {pipeline_mode = #tpu.pipeline_mode<synchronous>, transform_indices = @transform_6, window_bounds = array<i64: 1, 32>}, {pipeline_mode = #tpu.pipeline_mode<synchronous>, transform_indices = @transform_7, window_bounds = array<i64: 32, 32>}, {pipeline_mode = #tpu.pipeline_mode<synchronous>, transform_indices = @transform_8, window_bounds = array<i64: 1, 32>}, {pipeline_mode = #tpu.pipeline_mode<synchronous>, transform_indices = @transform_9, window_bounds = array<i64: 32, 32>}, {pipeline_mode = #tpu.pipeline_mode<synchronous>, transform_indices = @transform_10, window_bounds = array<i64: 1, 32>}, {pipeline_mode = #tpu.pipeline_mode<synchronous>, transform_indices = @transform_11, window_bounds = array<i64: 1, 32>}, {pipeline_mode = #tpu.pipeline_mode<synchronous>, transform_indices = @transform_12, window_bounds = array<i64: 1, 32>}, {pipeline_mode = #tpu.pipeline_mode<synchronous>, transform_indices = @transform_13, window_bounds = array<i64: 32, 64>}, {pipeline_mode = #tpu.pipeline_mode<synchronous>, transform_indices = @transform_14, window_bounds = array<i64: 1, 64>}, {pipeline_mode = #tpu.pipeline_mode<synchronous>, transform_indices = @transform_15, window_bounds = array<i64: 64, 32>}, {pipeline_mode = #tpu.pipeline_mode<synchronous>, transform_indices = @transform_16, window_bounds = array<i64: 1, 32>}, {pipeline_mode = #tpu.pipeline_mode<synchronous>, transform_indices = @transform_17, window_bounds = array<i64: 1, 32>}, {pipeline_mode = #tpu.pipeline_mode<synchronous>, transform_indices = @transform_18, window_bounds = array<i64: 1, 32>}, {transform_indices = @transform_19, window_bounds = array<i64: 1, 8, 32>}]} {
    %c0 = arith.constant 0 : index
    %c0_0 = arith.constant 0 : index
    %c0_1 = arith.constant 0 : index
    %0 = vector.load %arg2[%c0, %c0_0, %c0_1] : memref<1x8x32xf32, #tpu.memory_space<vmem>>, vector<1x8x32xf32>
    %1 = vector.shape_cast %0 : vector<1x8x32xf32> to vector<8x32xf32>
    %c0_2 = arith.constant 0 : index
    %c0_3 = arith.constant 0 : index
    %c0_4 = arith.constant 0 : index
    %2 = vector.load %arg3[%c0_2, %c0_3, %c0_4] : memref<1x8x32xf32, #tpu.memory_space<vmem>>, vector<1x8x32xf32>
    %3 = vector.shape_cast %2 : vector<1x8x32xf32> to vector<8x32xf32>
    %4 = arith.truncf %1 : vector<8x32xf32> to vector<8x32xbf16>
    %5 = arith.truncf %3 : vector<8x32xf32> to vector<8x32xbf16>
    %c0_5 = arith.constant 0 : index
    %c0_6 = arith.constant 0 : index
    %6 = vector.load %arg5[%c0_5, %c0_6] : memref<32x32xbf16, #tpu.memory_space<vmem>>, vector<32x32xbf16>
    %cst = arith.constant dense<0.000000e+00> : vector<8x32xf32>
    %7 = tpu.matmul %4, %6, %cst {dimension_numbers = #tpu.dot_dimension_numbers<[1], [0], [0], [1], [0, 0, 1, 1], [], []>} : vector<8x32xbf16>, vector<32x32xbf16>, vector<8x32xf32> -> vector<8x32xf32>
    %c0_7 = arith.constant 0 : index
    %c0_8 = arith.constant 0 : index
    %8 = vector.load %arg6[%c0_7, %c0_8] : memref<1x32xf32, #tpu.memory_space<vmem>>, vector<1x32xf32>
    %9 = vector.broadcast %8 : vector<1x32xf32> to vector<8x32xf32>
    %10 = arith.addf %7, %9 : vector<8x32xf32>
    %c0_9 = arith.constant 0 : index
    %c0_10 = arith.constant 0 : index
    %11 = vector.load %arg7[%c0_9, %c0_10] : memref<32x32xbf16, #tpu.memory_space<vmem>>, vector<32x32xbf16>
    %cst_11 = arith.constant dense<0.000000e+00> : vector<8x32xf32>
    %12 = tpu.matmul %5, %11, %cst_11 {dimension_numbers = #tpu.dot_dimension_numbers<[1], [0], [0], [1], [0, 0, 1, 1], [], []>} : vector<8x32xbf16>, vector<32x32xbf16>, vector<8x32xf32> -> vector<8x32xf32>
    %c0_12 = arith.constant 0 : index
    %c0_13 = arith.constant 0 : index
    %13 = vector.load %arg8[%c0_12, %c0_13] : memref<1x32xf32, #tpu.memory_space<vmem>>, vector<1x32xf32>
    %14 = vector.broadcast %13 : vector<1x32xf32> to vector<8x32xf32>
    %15 = arith.addf %12, %14 : vector<8x32xf32>
    %c0_14 = arith.constant 0 : index
    %c0_15 = arith.constant 0 : index
    %16 = vector.load %arg9[%c0_14, %c0_15] : memref<32x32xbf16, #tpu.memory_space<vmem>>, vector<32x32xbf16>
    %cst_16 = arith.constant dense<0.000000e+00> : vector<8x32xf32>
    %17 = tpu.matmul %5, %16, %cst_16 {dimension_numbers = #tpu.dot_dimension_numbers<[1], [0], [0], [1], [0, 0, 1, 1], [], []>} : vector<8x32xbf16>, vector<32x32xbf16>, vector<8x32xf32> -> vector<8x32xf32>
    %c0_17 = arith.constant 0 : index
    %c0_18 = arith.constant 0 : index
    %18 = vector.load %arg10[%c0_17, %c0_18] : memref<1x32xf32, #tpu.memory_space<vmem>>, vector<1x32xf32>
    %19 = vector.broadcast %18 : vector<1x32xf32> to vector<8x32xf32>
    %20 = arith.addf %17, %19 : vector<8x32xf32>
    %21 = vector.shape_cast %10 : vector<8x32xf32> to vector<8x4x8xf32>
    %22 = tpu.transpose %21, [1, 0, 2] : vector<8x4x8xf32> -> vector<4x8x8xf32>
    %23 = arith.truncf %22 : vector<4x8x8xf32> to vector<4x8x8xbf16>
    %24 = vector.shape_cast %15 : vector<8x32xf32> to vector<8x4x8xf32>
    %25 = tpu.transpose %24, [1, 0, 2] : vector<8x4x8xf32> -> vector<4x8x8xf32>
    %26 = arith.truncf %25 : vector<4x8x8xf32> to vector<4x8x8xbf16>
    %27 = vector.shape_cast %20 : vector<8x32xf32> to vector<8x4x8xf32>
    %28 = tpu.transpose %27, [1, 0, 2] : vector<8x4x8xf32> -> vector<4x8x8xf32>
    %29 = arith.truncf %28 : vector<4x8x8xf32> to vector<4x8x8xbf16>
    "tpu.trace_start"() <{level = 10 : i32, message = "hqd,hkd->hqk"}> : () -> ()
    %cst_19 = arith.constant dense<0.000000e+00> : vector<4x8x8xf32>
    %30 = tpu.matmul %23, %26, %cst_19 {dimension_numbers = #tpu.dot_dimension_numbers<[2], [2], [1], [1], [0, 0, 0, 1, 1, 1], [0], [0]>} : vector<4x8x8xbf16>, vector<4x8x8xbf16>, vector<4x8x8xf32> -> vector<4x8x8xf32>
    "tpu.trace_stop"() : () -> ()
    %c0_20 = arith.constant 0 : index
    %c0_21 = arith.constant 0 : index
    %c0_22 = arith.constant 0 : index
    %31 = vector.load %arg4[%c0_20, %c0_21, %c0_22] : memref<1x1x8xf32, #tpu.memory_space<vmem>>, vector<1x1x8xf32>
    %32 = vector.broadcast %31 : vector<1x1x8xf32> to vector<4x8x8xf32>
    %33 = arith.addf %30, %32 : vector<4x8x8xf32>
    %cst_23 = arith.constant dense<0xFF800000> : vector<4x8xf32>
    %34 = vector.multi_reduction <maximumf>, %33, %cst_23 [2] : vector<4x8x8xf32> to vector<4x8xf32>
    %35 = vector.shape_cast %34 : vector<4x8xf32> to vector<4x8x1xf32>
    %36 = vector.broadcast %35 : vector<4x8x1xf32> to vector<4x8x8xf32>
    %37 = arith.subf %33, %36 : vector<4x8x8xf32>
    %38 = math.exp %37 : vector<4x8x8xf32>
    %cst_24 = arith.constant dense<0.000000e+00> : vector<4x8xf32>
    %39 = vector.multi_reduction <add>, %38, %cst_24 [2] : vector<4x8x8xf32> to vector<4x8xf32>
    %40 = vector.shape_cast %39 : vector<4x8xf32> to vector<4x8x1xf32>
    %41 = tpu.reciprocal %40 {approx = true} : vector<4x8x1xf32> -> vector<4x8x1xf32>
    %42 = vector.broadcast %41 : vector<4x8x1xf32> to vector<4x8x8xf32>
    %43 = arith.mulf %38, %42 : vector<4x8x8xf32>
    %44 = arith.truncf %43 : vector<4x8x8xf32> to vector<4x8x8xbf16>
    "tpu.trace_start"() <{level = 10 : i32, message = "hqk,hkd->hqd"}> : () -> ()
    %cst_25 = arith.constant dense<0.000000e+00> : vector<4x8x8xf32>
    %45 = tpu.matmul %44, %29, %cst_25 {dimension_numbers = #tpu.dot_dimension_numbers<[2], [1], [1], [2], [0, 0, 0, 1, 1, 2], [0], [0]>} : vector<4x8x8xbf16>, vector<4x8x8xbf16>, vector<4x8x8xf32> -> vector<4x8x8xf32>
    "tpu.trace_stop"() : () -> ()
    %46 = tpu.transpose %45, [1, 0, 2] : vector<4x8x8xf32> -> vector<8x4x8xf32>
    %47 = vector.shape_cast %46 : vector<8x4x8xf32> to vector<8x32xf32>
    %48 = arith.truncf %47 : vector<8x32xf32> to vector<8x32xbf16>
    %c0_26 = arith.constant 0 : index
    %c0_27 = arith.constant 0 : index
    %49 = vector.load %arg11[%c0_26, %c0_27] : memref<32x32xbf16, #tpu.memory_space<vmem>>, vector<32x32xbf16>
    %cst_28 = arith.constant dense<0.000000e+00> : vector<8x32xf32>
    %50 = tpu.matmul %48, %49, %cst_28 {dimension_numbers = #tpu.dot_dimension_numbers<[1], [0], [0], [1], [0, 0, 1, 1], [], []>} : vector<8x32xbf16>, vector<32x32xbf16>, vector<8x32xf32> -> vector<8x32xf32>
    %c0_29 = arith.constant 0 : index
    %c0_30 = arith.constant 0 : index
    %51 = vector.load %arg12[%c0_29, %c0_30] : memref<1x32xf32, #tpu.memory_space<vmem>>, vector<1x32xf32>
    %52 = vector.broadcast %51 : vector<1x32xf32> to vector<8x32xf32>
    %53 = arith.addf %50, %52 : vector<8x32xf32>
    %54 = arith.addf %1, %53 : vector<8x32xf32>
    %c0_31 = arith.constant 0 : index
    %c0_32 = arith.constant 0 : index
    %55 = vector.load %arg13[%c0_31, %c0_32] : memref<1x32xf32, #tpu.memory_space<vmem>>, vector<1x32xf32>
    %c0_33 = arith.constant 0 : index
    %c0_34 = arith.constant 0 : index
    %56 = vector.load %arg14[%c0_33, %c0_34] : memref<1x32xf32, #tpu.memory_space<vmem>>, vector<1x32xf32>
    %cst_35 = arith.constant dense<0.000000e+00> : vector<8xf32>
    %57 = vector.multi_reduction <add>, %54, %cst_35 [1] : vector<8x32xf32> to vector<8xf32>
    %58 = vector.shape_cast %57 : vector<8xf32> to vector<8x1xf32>
    %cst_36 = arith.constant 3.200000e+01 : f32
    %59 = vector.broadcast %cst_36 : f32 to vector<8x1xf32>
    %60 = arith.divf %58, %59 : vector<8x1xf32>
    %61 = vector.broadcast %60 : vector<8x1xf32> to vector<8x32xf32>
    %62 = arith.subf %54, %61 : vector<8x32xf32>
    %63 = arith.mulf %62, %62 : vector<8x32xf32>
    %cst_37 = arith.constant dense<0.000000e+00> : vector<8xf32>
    %64 = vector.multi_reduction <add>, %63, %cst_37 [1] : vector<8x32xf32> to vector<8xf32>
    %65 = vector.shape_cast %64 : vector<8xf32> to vector<8x1xf32>
    %cst_38 = arith.constant 3.200000e+01 : f32
    %66 = vector.broadcast %cst_38 : f32 to vector<8x1xf32>
    %67 = arith.divf %65, %66 : vector<8x1xf32>
    %cst_39 = arith.constant 9.99999974E-6 : f32
    %68 = vector.broadcast %cst_39 : f32 to vector<8x1xf32>
    %69 = arith.addf %67, %68 : vector<8x1xf32>
    %70 = math.rsqrt %69 : vector<8x1xf32>
    %71 = vector.broadcast %60 : vector<8x1xf32> to vector<8x32xf32>
    %72 = arith.subf %54, %71 : vector<8x32xf32>
    %73 = vector.broadcast %70 : vector<8x1xf32> to vector<8x32xf32>
    %74 = arith.mulf %72, %73 : vector<8x32xf32>
    %75 = vector.broadcast %55 : vector<1x32xf32> to vector<8x32xf32>
    %76 = arith.mulf %74, %75 : vector<8x32xf32>
    %77 = vector.broadcast %56 : vector<1x32xf32> to vector<8x32xf32>
    %78 = arith.addf %76, %77 : vector<8x32xf32>
    %79 = arith.truncf %78 : vector<8x32xf32> to vector<8x32xbf16>
    %c0_40 = arith.constant 0 : index
    %c0_41 = arith.constant 0 : index
    %80 = vector.load %arg15[%c0_40, %c0_41] : memref<32x64xbf16, #tpu.memory_space<vmem>>, vector<32x64xbf16>
    %cst_42 = arith.constant dense<0.000000e+00> : vector<8x64xf32>
    %81 = tpu.matmul %79, %80, %cst_42 {dimension_numbers = #tpu.dot_dimension_numbers<[1], [0], [0], [1], [0, 0, 1, 1], [], []>} : vector<8x32xbf16>, vector<32x64xbf16>, vector<8x64xf32> -> vector<8x64xf32>
    %c0_43 = arith.constant 0 : index
    %c0_44 = arith.constant 0 : index
    %82 = vector.load %arg16[%c0_43, %c0_44] : memref<1x64xf32, #tpu.memory_space<vmem>>, vector<1x64xf32>
    %83 = vector.broadcast %82 : vector<1x64xf32> to vector<8x64xf32>
    %84 = arith.addf %81, %83 : vector<8x64xf32>
    %cst_45 = arith.constant 0.000000e+00 : f32
    %85 = vector.broadcast %cst_45 : f32 to vector<8x64xf32>
    %86 = arith.maximumf %84, %85 : vector<8x64xf32>
    %87 = arith.truncf %86 : vector<8x64xf32> to vector<8x64xbf16>
    %c0_46 = arith.constant 0 : index
    %c0_47 = arith.constant 0 : index
    %88 = vector.load %arg17[%c0_46, %c0_47] : memref<64x32xbf16, #tpu.memory_space<vmem>>, vector<64x32xbf16>
    %cst_48 = arith.constant dense<0.000000e+00> : vector<8x32xf32>
    %89 = tpu.matmul %87, %88, %cst_48 {dimension_numbers = #tpu.dot_dimension_numbers<[1], [0], [0], [1], [0, 0, 1, 1], [], []>} : vector<8x64xbf16>, vector<64x32xbf16>, vector<8x32xf32> -> vector<8x32xf32>
    %c0_49 = arith.constant 0 : index
    %c0_50 = arith.constant 0 : index
    %90 = vector.load %arg18[%c0_49, %c0_50] : memref<1x32xf32, #tpu.memory_space<vmem>>, vector<1x32xf32>
    %91 = vector.broadcast %90 : vector<1x32xf32> to vector<8x32xf32>
    %92 = arith.addf %89, %91 : vector<8x32xf32>
    %93 = arith.addf %78, %92 : vector<8x32xf32>
    %c0_51 = arith.constant 0 : index
    %c0_52 = arith.constant 0 : index
    %94 = vector.load %arg19[%c0_51, %c0_52] : memref<1x32xf32, #tpu.memory_space<vmem>>, vector<1x32xf32>
    %c0_53 = arith.constant 0 : index
    %c0_54 = arith.constant 0 : index
    %95 = vector.load %arg20[%c0_53, %c0_54] : memref<1x32xf32, #tpu.memory_space<vmem>>, vector<1x32xf32>
    %cst_55 = arith.constant dense<0.000000e+00> : vector<8xf32>
    %96 = vector.multi_reduction <add>, %93, %cst_55 [1] : vector<8x32xf32> to vector<8xf32>
    %97 = vector.shape_cast %96 : vector<8xf32> to vector<8x1xf32>
    %cst_56 = arith.constant 3.200000e+01 : f32
    %98 = vector.broadcast %cst_56 : f32 to vector<8x1xf32>
    %99 = arith.divf %97, %98 : vector<8x1xf32>
    %100 = vector.broadcast %99 : vector<8x1xf32> to vector<8x32xf32>
    %101 = arith.subf %93, %100 : vector<8x32xf32>
    %102 = arith.mulf %101, %101 : vector<8x32xf32>
    %cst_57 = arith.constant dense<0.000000e+00> : vector<8xf32>
    %103 = vector.multi_reduction <add>, %102, %cst_57 [1] : vector<8x32xf32> to vector<8xf32>
    %104 = vector.shape_cast %103 : vector<8xf32> to vector<8x1xf32>
    %cst_58 = arith.constant 3.200000e+01 : f32
    %105 = vector.broadcast %cst_58 : f32 to vector<8x1xf32>
    %106 = arith.divf %104, %105 : vector<8x1xf32>
    %cst_59 = arith.constant 9.99999974E-6 : f32
    %107 = vector.broadcast %cst_59 : f32 to vector<8x1xf32>
    %108 = arith.addf %106, %107 : vector<8x1xf32>
    %109 = math.rsqrt %108 : vector<8x1xf32>
    %110 = vector.broadcast %99 : vector<8x1xf32> to vector<8x32xf32>
    %111 = arith.subf %93, %110 : vector<8x32xf32>
    %112 = vector.broadcast %109 : vector<8x1xf32> to vector<8x32xf32>
    %113 = arith.mulf %111, %112 : vector<8x32xf32>
    %114 = vector.broadcast %94 : vector<1x32xf32> to vector<8x32xf32>
    %115 = arith.mulf %113, %114 : vector<8x32xf32>
    %116 = vector.broadcast %95 : vector<1x32xf32> to vector<8x32xf32>
    %117 = arith.addf %115, %116 : vector<8x32xf32>
    %c0_60 = arith.constant 0 : index
    %c0_61 = arith.constant 0 : index
    %c0_62 = arith.constant 0 : index
    %118 = vector.load %arg21[%c0_60, %c0_61, %c0_62] : memref<1x8x32xf32, #tpu.memory_space<vmem>>, vector<1x8x32xf32>
    %119 = vector.shape_cast %118 : vector<1x8x32xf32> to vector<8x32xf32>
    %120 = vector.shape_cast %117 : vector<8x32xf32> to vector<1x8x32xf32>
    tpu.vector_store %arg21[%c0_60, %c0_61, %c0_62], %120 {strides = array<i32>} : memref<1x8x32xf32, #tpu.memory_space<vmem>>, vector<1x8x32xf32>,
    return
  }
  func.func @transform_0(%arg0: i32, %arg1: i32) -> (i32, i32, i32) {
    %c0_i32 = arith.constant 0 : i32
    %c0_i32_0 = arith.constant 0 : i32
    return %arg0, %arg1, %c0_i32 : i32, i32, i32
  }
  func.func @transform_1(%arg0: i32, %arg1: i32) -> (i32, i32, i32) {
    %c0_i32 = arith.constant 0 : i32
    %c0_i32_0 = arith.constant 0 : i32
    %c0_i32_1 = arith.constant 0 : i32
    return %arg0, %c0_i32, %c0_i32_0 : i32, i32, i32
  }
  func.func @transform_2(%arg0: i32, %arg1: i32) -> (i32, i32, i32) {
    %c0_i32 = arith.constant 0 : i32
    %c0_i32_0 = arith.constant 0 : i32
    %c0_i32_1 = arith.constant 0 : i32
    return %arg0, %c0_i32, %c0_i32_0 : i32, i32, i32
  }
  func.func @transform_3(%arg0: i32, %arg1: i32) -> (i32, i32) {
    %c0_i32 = arith.constant 0 : i32
    %c0_i32_0 = arith.constant 0 : i32
    %c0_i32_1 = arith.constant 0 : i32
    return %c0_i32, %c0_i32_0 : i32, i32
  }
  func.func @transform_4(%arg0: i32, %arg1: i32) -> (i32, i32) {
    %c0_i32 = arith.constant 0 : i32
    %c0_i32_0 = arith.constant 0 : i32
    %c0_i32_1 = arith.constant 0 : i32
    return %c0_i32, %c0_i32_0 : i32, i32
  }
  func.func @transform_5(%arg0: i32, %arg1: i32) -> (i32, i32) {
    %c0_i32 = arith.constant 0 : i32
    %c0_i32_0 = arith.constant 0 : i32
    %c0_i32_1 = arith.constant 0 : i32
    return %c0_i32, %c0_i32_0 : i32, i32
  }
  func.func @transform_6(%arg0: i32, %arg1: i32) -> (i32, i32) {
    %c0_i32 = arith.constant 0 : i32
    %c0_i32_0 = arith.constant 0 : i32
    %c0_i32_1 = arith.constant 0 : i32
    return %c0_i32, %c0_i32_0 : i32, i32
  }
  func.func @transform_7(%arg0: i32, %arg1: i32) -> (i32, i32) {
    %c0_i32 = arith.constant 0 : i32
    %c0_i32_0 = arith.constant 0 : i32
    %c0_i32_1 = arith.constant 0 : i32
    return %c0_i32, %c0_i32_0 : i32, i32
  }
  func.func @transform_8(%arg0: i32, %arg1: i32) -> (i32, i32) {
    %c0_i32 = arith.constant 0 : i32
    %c0_i32_0 = arith.constant 0 : i32
    %c0_i32_1 = arith.constant 0 : i32
    return %c0_i32, %c0_i32_0 : i32, i32
  }
  func.func @transform_9(%arg0: i32, %arg1: i32) -> (i32, i32) {
    %c0_i32 = arith.constant 0 : i32
    %c0_i32_0 = arith.constant 0 : i32
    %c0_i32_1 = arith.constant 0 : i32
    return %c0_i32, %c0_i32_0 : i32, i32
  }
  func.func @transform_10(%arg0: i32, %arg1: i32) -> (i32, i32) {
    %c0_i32 = arith.constant 0 : i32
    %c0_i32_0 = arith.constant 0 : i32
    %c0_i32_1 = arith.constant 0 : i32
    return %c0_i32, %c0_i32_0 : i32, i32
  }
  func.func @transform_11(%arg0: i32, %arg1: i32) -> (i32, i32) {
    %c0_i32 = arith.constant 0 : i32
    %c0_i32_0 = arith.constant 0 : i32
    %c0_i32_1 = arith.constant 0 : i32
    return %c0_i32, %c0_i32_0 : i32, i32
  }
  func.func @transform_12(%arg0: i32, %arg1: i32) -> (i32, i32) {
    %c0_i32 = arith.constant 0 : i32
    %c0_i32_0 = arith.constant 0 : i32
    %c0_i32_1 = arith.constant 0 : i32
    return %c0_i32, %c0_i32_0 : i32, i32
  }
  func.func @transform_13(%arg0: i32, %arg1: i32) -> (i32, i32) {
    %c0_i32 = arith.constant 0 : i32
    %c0_i32_0 = arith.constant 0 : i32
    %c0_i32_1 = arith.constant 0 : i32
    return %c0_i32, %c0_i32_0 : i32, i32
  }
  func.func @transform_14(%arg0: i32, %arg1: i32) -> (i32, i32) {
    %c0_i32 = arith.constant 0 : i32
    %c0_i32_0 = arith.constant 0 : i32
    %c0_i32_1 = arith.constant 0 : i32
    return %c0_i32, %c0_i32_0 : i32, i32
  }
  func.func @transform_15(%arg0: i32, %arg1: i32) -> (i32, i32) {
    %c0_i32 = arith.constant 0 : i32
    %c0_i32_0 = arith.constant 0 : i32
    %c0_i32_1 = arith.constant 0 : i32
    return %c0_i32, %c0_i32_0 : i32, i32
  }
  func.func @transform_16(%arg0: i32, %arg1: i32) -> (i32, i32) {
    %c0_i32 = arith.constant 0 : i32
    %c0_i32_0 = arith.constant 0 : i32
    %c0_i32_1 = arith.constant 0 : i32
    return %c0_i32, %c0_i32_0 : i32, i32
  }
  func.func @transform_17(%arg0: i32, %arg1: i32) -> (i32, i32) {
    %c0_i32 = arith.constant 0 : i32
    %c0_i32_0 = arith.constant 0 : i32
    %c0_i32_1 = arith.constant 0 : i32
    return %c0_i32, %c0_i32_0 : i32, i32
  }
  func.func @transform_18(%arg0: i32, %arg1: i32) -> (i32, i32) {
    %c0_i32 = arith.constant 0 : i32
    %c0_i32_0 = arith.constant 0 : i32
    %c0_i32_1 = arith.constant 0 : i32
    return %c0_i32, %c0_i32_0 : i32, i32
  }
  func.func @transform_19(%arg0: i32, %arg1: i32) -> (i32, i32, i32) {
    %c0_i32 = arith.constant 0 : i32
    %c0_i32_0 = arith.constant 0 : i32
    return %arg0, %arg1, %c0_i32 : i32, i32, i32
  }
}

</mosaic_0001>

<llo_original>
// kernel: tpu_custom_call.1
$region0: #{tpu_custom_call.1}
  #allocation0 [shape = 'u32[]', space=smem, size = 0x4, offset = 0x4, fixed_abs, tag = 'smem constant byte address 0x4 - core index']
  #allocation1 [shape = 'u32[144,128]{1,0:T(1,128)}', space=vmem, size = 0x12000, scoped, tag = 'internal scratch']
  %s0 = inlined_call_operand.hbm [shape: f32[2,8,32], index: 0, kind: input, shape index: {}]
  %s1 = inlined_call_operand.hbm [shape: f32[2,8,32], index: 1, kind: input, shape index: {}]
  %s2 = inlined_call_operand.hbm [shape: f32[2,1,8], index: 2, kind: input, shape index: {}]
  %s3 = inlined_call_operand.hbm [shape: bf16[32,32], index: 3, kind: input, shape index: {}]
  %s4 = inlined_call_operand.hbm [shape: f32[1,32], index: 4, kind: input, shape index: {}]
  %s5 = inlined_call_operand.hbm [shape: bf16[32,32], index: 5, kind: input, shape index: {}]
  %s6 = inlined_call_operand.hbm [shape: f32[1,32], index: 6, kind: input, shape index: {}]
  %s7 = inlined_call_operand.hbm [shape: bf16[32,32], index: 7, kind: input, shape index: {}]
  %s8 = inlined_call_operand.hbm [shape: f32[1,32], index: 8, kind: input, shape index: {}]
  %s9 = inlined_call_operand.hbm [shape: bf16[32,32], index: 9, kind: input, shape index: {}]
  %s10 = inlined_call_operand.hbm [shape: f32[1,32], index: 10, kind: input, shape index: {}]
  %s11 = inlined_call_operand.hbm [shape: f32[1,32], index: 11, kind: input, shape index: {}]
  %s12 = inlined_call_operand.hbm [shape: f32[1,32], index: 12, kind: input, shape index: {}]
  %s13 = inlined_call_operand.hbm [shape: bf16[32,64], index: 13, kind: input, shape index: {}]
  %s14 = inlined_call_operand.hbm [shape: f32[1,64], index: 14, kind: input, shape index: {}]
  %s15 = inlined_call_operand.hbm [shape: bf16[64,32], index: 15, kind: input, shape index: {}]
  %s16 = inlined_call_operand.hbm [shape: f32[1,32], index: 16, kind: input, shape index: {}]
  %s17 = inlined_call_operand.hbm [shape: f32[1,32], index: 17, kind: input, shape index: {}]
  %s18 = inlined_call_operand.hbm [shape: f32[1,32], index: 18, kind: input, shape index: {}]
  %s19 = inlined_call_operand.hbm [shape: f32[2,8,32], index: 19, kind: output, shape index: {}]
  %s20 = sld [smem:[#allocation0]]
  $region185: #{tpu_custom_call.1} parent=0
    _
  %s22 = ssub.s32 1, %s20
  %s23 = scalar_select 0, %s22, %s20
  $region1: #{tpu_custom_call.1} parent=0
    #allocation2 [shape = 'u8[8192]{0}', space=vmem, size = 0x2000, scoped, tag = 'input window, operand 0']
    #allocation3 [shape = 's32[2]{0}', space=sflag, size = 0x8, scoped, tag = 'scoped memory for tpu_custom_call.1']
    #allocation4 [shape = 's32[2]{0}', space=sflag, size = 0x8, scoped, tag = 'scoped memory for tpu_custom_call.1']
    #allocation5 [shape = 'u8[8192]{0}', space=vmem, size = 0x2000, scoped, tag = 'input window, operand 1']
    #allocation6 [shape = 's32[2]{0}', space=sflag, size = 0x8, scoped, tag = 'scoped memory for tpu_custom_call.1']
    #allocation7 [shape = 'u8[1024]{0}', space=vmem, size = 0x400, scoped, tag = 'input window, operand 2']
    #allocation8 [shape = 'u8[8192]{0}', space=vmem, size = 0x2000, scoped, tag = 'input window, operand 3, single buffered']
    #allocation9 [shape = 's32[1]{0}', space=sflag, size = 0x4, scoped, tag = 'scoped memory for tpu_custom_call.1']
    #allocation10 [shape = 'u8[512]{0}', space=vmem, size = 0x400, scoped, tag = 'input window, operand 4, single buffered']
    #allocation11 [shape = 'u8[8192]{0}', space=vmem, size = 0x2000, scoped, tag = 'input window, operand 5, single buffered']
    #allocation12 [shape = 's32[1]{0}', space=sflag, size = 0x4, scoped, tag = 'scoped memory for tpu_custom_call.1']
    #allocation13 [shape = 'u8[512]{0}', space=vmem, size = 0x400, scoped, tag = 'input window, operand 6, single buffered']
    #allocation14 [shape = 'u8[8192]{0}', space=vmem, size = 0x2000, scoped, tag = 'input window, operand 7, single buffered']
    #allocation15 [shape = 's32[1]{0}', space=sflag, size = 0x4, scoped, tag = 'scoped memory for tpu_custom_call.1']
    #allocation16 [shape = 'u8[512]{0}', space=vmem, size = 0x400, scoped, tag = 'input window, operand 8, single buffered']
    #allocation17 [shape = 'u8[8192]{0}', space=vmem, size = 0x2000, scoped, tag = 'input window, operand 9, single buffered']
    #allocation18 [shape = 's32[1]{0}', space=sflag, size = 0x4, scoped, tag = 'scoped memory for tpu_custom_call.1']
    #allocation19 [shape = 'u8[512]{0}', space=vmem, size = 0x400, scoped, tag = 'input window, operand 10, single buffered']
    #allocation20 [shape = 'u8[512]{0}', space=vmem, size = 0x400, scoped, tag = 'input window, operand 11, single buffered']
    #allocation21 [shape = 's32[1]{0}', space=sflag, size = 0x4, scoped, tag = 'scoped memory for tpu_custom_call.1']
    #allocation22 [shape = 'u8[512]{0}', space=vmem, size = 0x400, scoped, tag = 'input window, operand 12, single buffered']
    #allocation23 [shape = 'u8[8192]{0}', space=vmem, size = 0x2000, scoped, tag = 'input window, operand 13, single buffered']
    #allocation24 [shape = 's32[1]{0}', space=sflag, size = 0x4, scoped, tag = 'scoped memory for tpu_custom_call.1']
    #allocation25 [shape = 'u8[512]{0}', space=vmem, size = 0x400, scoped, tag = 'input window, operand 14, single buffered']
    #allocation26 [shape = 'u8[16384]{0}', space=vmem, size = 0x4000, scoped, tag = 'input window, operand 15, single buffered']
    #allocation27 [shape = 's32[1]{0}', space=sflag, size = 0x4, scoped, tag = 'scoped memory for tpu_custom_call.1']
    #allocation28 [shape = 'u8[512]{0}', space=vmem, size = 0x400, scoped, tag = 'input window, operand 16, single buffered']
    #allocation29 [shape = 'u8[512]{0}', space=vmem, size = 0x400, scoped, tag = 'input window, operand 17, single buffered']
    #allocation30 [shape = 's32[1]{0}', space=sflag, size = 0x4, scoped, tag = 'scoped memory for tpu_custom_call.1']
    #allocation31 [shape = 'u8[512]{0}', space=vmem, size = 0x400, scoped, tag = 'input window, operand 18, single buffered']
    #allocation32 [shape = 'u8[8192]{0}', space=vmem, size = 0x2000, scoped, tag = 'output window, operand 0']
    %24 = vsyncpa [#allocation3], 0
    %s25 = scalar_lea.sflag [#allocation3], 1
    %26 = vsyncpa %s25, 0
    %27 = vsyncpa [#allocation6], 0
    %s28 = scalar_lea.sflag [#allocation6], 1
    %29 = vsyncpa %s28, 0
    %30 = vsyncpa [#allocation9], 0
    %31 = vsyncpa [#allocation12], 0
    %32 = vsyncpa [#allocation15], 0
    %33 = vsyncpa [#allocation18], 0
    %34 = vsyncpa [#allocation21], 0
    %35 = vsyncpa [#allocation24], 0
    %36 = vsyncpa [#allocation27], 0
    %37 = vsyncpa [#allocation30], 0
    %38 = vsyncpa [#allocation4], 0
    %s39 = scalar_lea.sflag [#allocation4], 1
    %40 = vsyncpa %s39, 0
    loop: start=0, step=1, limit=4
    $region2: #{tpu_custom_call.1} parent=1 // loop_pre_header
      _
    $region3: #{tpu_custom_call.1} parent=1 // loop_header
      %s42 = sphi 0, %s46
      %p43 = scmp.ge.s32.totalorder %s42, 4
      %s49 = sphi 0, %s61
      %s50 = sphi 0, %s57
      %s51 = sphi 0, %s49
      %s52 = sphi 0, %s50
      %s53 = sphi 0, %s51
      %s54 = sphi 0, %s52
      %s66 = sphi 0, %s68
      %s69 = sphi 0, %s66
      %s70 = sphi 0, %s69
      %s86 = sphi 0, %s70
      %s92 = sphi 0, %s94
      %s95 = sphi 0, %s92
      %s96 = sphi 0, %s95
      %s112 = sphi 0, %s96
      %s118 = sphi 0, %s120
      %s121 = sphi 0, %s118
      %s122 = sphi 0, %s121
      %s138 = sphi 0, %s122
      %s142 = sphi 0, %s142
      %s144 = sphi 0, %s142
      %s145 = sphi 0, %s144
      %s159 = sphi 0, %s145
      %s163 = sphi 0, %s163
      %s165 = sphi 0, %s163
      %s166 = sphi 0, %s165
      %s180 = sphi 0, %s166
      %s184 = sphi 0, %s184
      %s186 = sphi 0, %s184
      %s187 = sphi 0, %s186
      %s201 = sphi 0, %s187
      %s205 = sphi 0, %s205
      %s207 = sphi 0, %s205
      %s208 = sphi 0, %s207
      %s222 = sphi 0, %s208
      %s226 = sphi 0, %s226
      %s228 = sphi 0, %s226
      %s229 = sphi 0, %s228
      %s243 = sphi 0, %s229
      %s247 = sphi 0, %s247
      %s249 = sphi 0, %s247
      %s250 = sphi 0, %s249
      %s264 = sphi 0, %s250
      %s268 = sphi 0, %s268
      %s270 = sphi 0, %s268
      %s271 = sphi 0, %s270
      %s285 = sphi 0, %s271
      %s289 = sphi 0, %s289
      %s291 = sphi 0, %s289
      %s292 = sphi 0, %s291
      %s306 = sphi 0, %s292
      %s310 = sphi 0, %s310
      %s312 = sphi 0, %s310
      %s313 = sphi 0, %s312
      %s327 = sphi 0, %s313
      %s331 = sphi 0, %s331
      %s333 = sphi 0, %s331
      %s334 = sphi 0, %s333
      %s348 = sphi 0, %s334
      %s352 = sphi 0, %s352
      %s354 = sphi 0, %s352
      %s355 = sphi 0, %s354
      %s369 = sphi 0, %s355
      %s373 = sphi 0, %s373
      %s375 = sphi 0, %s373
      %s376 = sphi 0, %s375
      %s390 = sphi 0, %s376
      %s394 = sphi 0, %s394
      %s396 = sphi 0, %s394
      %s397 = sphi 0, %s396
      %s411 = sphi 0, %s397
      %s415 = sphi 0, %s415
      %s417 = sphi 0, %s415
      %s418 = sphi 0, %s417
      %s432 = sphi 0, %s418
      %s436 = sphi 0, %s436
      %s438 = sphi 0, %s436
      %s439 = sphi 0, %s438
      %s453 = sphi 0, %s439
      %s457 = sphi 0, %s457
      %s459 = sphi 0, %s457
      %s460 = sphi 0, %s459
      %s474 = sphi 0, %s460
      %s482 = sphi 0, %s484
      %s485 = sphi 0, %s482
      %s486 = sphi 0, %s485
      %s502 = sphi 0, %s486
    $region4: #{tpu_custom_call.1} parent=1 // loop_header_branch
      %45 = sbr.rel (%p43) target = $region8
    $region5: #{tpu_custom_call.1} parent=1 // loop_body
      %s47 = ssub.s32 %s42, 1
      %s48 = ssub.s32 %s42, 2
      %s55 = sadd.s32 1, %s50
      %p56 = scmp.ge.s32.totalorder %s55, 1
      %s57 = scalar_select %p56, 0, %s55
      %s58 = sadd.s32 1, %s49
      %s59 = scalar_select %p56, %s58, %s49
      %p60 = scmp.ge.s32.totalorder %s59, 2
      %s61 = scalar_select %p60, 0, %s59
      %s62 = ssub.s32 %s49, %s61
      %s63 = ssub.s32 %s50, %s57
      %s64 = sor.u32 %s62, %s63
      %p65 = scmp.eq.s32.totalorder %s64, 0
      %s67 = sadd.s32 %s66, 1
      %s68 = scalar_select %p65, %s66, %s67
      %p71 = pneg %p65
      %p72 = scmp.eq.s32.totalorder %s42, 1
      %p73 = por %p71, %p72
      %p74 = scmp.ne.s32.totalorder %s66, %s69
      %p75 = scmp.eq.s32.totalorder %s42, 0
      %p76 = por %p74, %p75
      %p77 = scmp.ne.s32.totalorder %s66, %s69
      %p78 = scmp.eq.s32.totalorder %s47, 1
      %p79 = por %p77, %p78
      %p80 = scmp.ne.s32.totalorder %s69, %s70
      %p81 = scmp.eq.s32.totalorder %s47, 0
      %p82 = por %p80, %p81
      %p83 = scmp.ne.s32.totalorder %s69, %s70
      %p84 = scmp.eq.s32.totalorder %s48, 1
      %p85 = por %p83, %p84
      %p87 = scmp.ne.s32.totalorder %s70, %s86
      %p88 = scmp.eq.s32.totalorder %s48, 0
      %p89 = por %p87, %p88
      %s90 = ssub.s32 %s49, %s61
      %p91 = scmp.eq.s32.totalorder %s90, 0
      %s93 = sadd.s32 %s92, 1
      %s94 = scalar_select %p91, %s92, %s93
      %p97 = pneg %p91
      %p98 = scmp.eq.s32.totalorder %s42, 1
      %p99 = por %p97, %p98
      %p100 = scmp.ne.s32.totalorder %s92, %s95
      %p101 = scmp.eq.s32.totalorder %s42, 0
      %p102 = por %p100, %p101
      %p103 = scmp.ne.s32.totalorder %s92, %s95
      %p104 = scmp.eq.s32.totalorder %s47, 1
      %p105 = por %p103, %p104
      %p106 = scmp.ne.s32.totalorder %s95, %s96
      %p107 = scmp.eq.s32.totalorder %s47, 0
      %p108 = por %p106, %p107
      %p109 = scmp.ne.s32.totalorder %s95, %s96
      %p110 = scmp.eq.s32.totalorder %s48, 1
      %p111 = por %p109, %p110
      %p113 = scmp.ne.s32.totalorder %s96, %s112
      %p114 = scmp.eq.s32.totalorder %s48, 0
      %p115 = por %p113, %p114
      %s116 = ssub.s32 %s49, %s61
      %p117 = scmp.eq.s32.totalorder %s116, 0
      %s119 = sadd.s32 %s118, 1
      %s120 = scalar_select %p117, %s118, %s119
      %p123 = pneg %p117
      %p124 = scmp.eq.s32.totalorder %s42, 1
      %p125 = por %p123, %p124
      %p126 = scmp.ne.s32.totalorder %s118, %s121
      %p127 = scmp.eq.s32.totalorder %s42, 0
      %p128 = por %p126, %p127
      %p129 = scmp.ne.s32.totalorder %s118, %s121
      %p130 = scmp.eq.s32.totalorder %s47, 1
      %p131 = por %p129, %p130
      %p132 = scmp.ne.s32.totalorder %s121, %s122
      %p133 = scmp.eq.s32.totalorder %s47, 0
      %p134 = por %p132, %p133
      %p135 = scmp.ne.s32.totalorder %s121, %s122
      %p136 = scmp.eq.s32.totalorder %s48, 1
      %p137 = por %p135, %p136
      %p139 = scmp.ne.s32.totalorder %s122, %s138
      %p140 = scmp.eq.s32.totalorder %s48, 0
      %p141 = por %p139, %p140
      %s143 = sadd.s32 %s142, 1
      %p146 = scmp.eq.s32.totalorder %s42, 1
      %p147 = scmp.ne.s32.totalorder %s142, %s144
      %p148 = scmp.eq.s32.totalorder %s42, 0
      %p149 = por %p147, %p148
      %p150 = scmp.ne.s32.totalorder %s142, %s144
      %p151 = scmp.eq.s32.totalorder %s47, 1
      %p152 = por %p150, %p151
      %p153 = scmp.ne.s32.totalorder %s144, %s145
      %p154 = scmp.eq.s32.totalorder %s47, 0
      %p155 = por %p153, %p154
      %p156 = scmp.ne.s32.totalorder %s144, %s145
      %p157 = scmp.eq.s32.totalorder %s48, 1
      %p158 = por %p156, %p157
      %p160 = scmp.ne.s32.totalorder %s145, %s159
      %p161 = scmp.eq.s32.totalorder %s48, 0
      %p162 = por %p160, %p161
      %s164 = sadd.s32 %s163, 1
      %p167 = scmp.eq.s32.totalorder %s42, 1
      %p168 = scmp.ne.s32.totalorder %s163, %s165
      %p169 = scmp.eq.s32.totalorder %s42, 0
      %p170 = por %p168, %p169
      %p171 = scmp.ne.s32.totalorder %s163, %s165
      %p172 = scmp.eq.s32.totalorder %s47, 1
      %p173 = por %p171, %p172
      %p174 = scmp.ne.s32.totalorder %s165, %s166
      %p175 = scmp.eq.s32.totalorder %s47, 0
      %p176 = por %p174, %p175
      %p177 = scmp.ne.s32.totalorder %s165, %s166
      %p178 = scmp.eq.s32.totalorder %s48, 1
      %p179 = por %p177, %p178
      %p181 = scmp.ne.s32.totalorder %s166, %s180
      %p182 = scmp.eq.s32.totalorder %s48, 0
      %p183 = por %p181, %p182
      %s185 = sadd.s32 %s184, 1
      %p188 = scmp.eq.s32.totalorder %s42, 1
      %p189 = scmp.ne.s32.totalorder %s184, %s186
      %p190 = scmp.eq.s32.totalorder %s42, 0
      %p191 = por %p189, %p190
      %p192 = scmp.ne.s32.totalorder %s184, %s186
      %p193 = scmp.eq.s32.totalorder %s47, 1
      %p194 = por %p192, %p193
      %p195 = scmp.ne.s32.totalorder %s186, %s187
      %p196 = scmp.eq.s32.totalorder %s47, 0
      %p197 = por %p195, %p196
      %p198 = scmp.ne.s32.totalorder %s186, %s187
      %p199 = scmp.eq.s32.totalorder %s48, 1
      %p200 = por %p198, %p199
      %p202 = scmp.ne.s32.totalorder %s187, %s201
      %p203 = scmp.eq.s32.totalorder %s48, 0
      %p204 = por %p202, %p203
      %s206 = sadd.s32 %s205, 1
      %p209 = scmp.eq.s32.totalorder %s42, 1
      %p210 = scmp.ne.s32.totalorder %s205, %s207
      %p211 = scmp.eq.s32.totalorder %s42, 0
      %p212 = por %p210, %p211
      %p213 = scmp.ne.s32.totalorder %s205, %s207
      %p214 = scmp.eq.s32.totalorder %s47, 1
      %p215 = por %p213, %p214
      %p216 = scmp.ne.s32.totalorder %s207, %s208
      %p217 = scmp.eq.s32.totalorder %s47, 0
      %p218 = por %p216, %p217
      %p219 = scmp.ne.s32.totalorder %s207, %s208
      %p220 = scmp.eq.s32.totalorder %s48, 1
      %p221 = por %p219, %p220
      %p223 = scmp.ne.s32.totalorder %s208, %s222
      %p224 = scmp.eq.s32.totalorder %s48, 0
      %p225 = por %p223, %p224
      %s227 = sadd.s32 %s226, 1
      %p230 = scmp.eq.s32.totalorder %s42, 1
      %p231 = scmp.ne.s32.totalorder %s226, %s228
      %p232 = scmp.eq.s32.totalorder %s42, 0
      %p233 = por %p231, %p232
      %p234 = scmp.ne.s32.totalorder %s226, %s228
      %p235 = scmp.eq.s32.totalorder %s47, 1
      %p236 = por %p234, %p235
      %p237 = scmp.ne.s32.totalorder %s228, %s229
      %p238 = scmp.eq.s32.totalorder %s47, 0
      %p239 = por %p237, %p238
      %p240 = scmp.ne.s32.totalorder %s228, %s229
      %p241 = scmp.eq.s32.totalorder %s48, 1
      %p242 = por %p240, %p241
      %p244 = scmp.ne.s32.totalorder %s229, %s243
      %p245 = scmp.eq.s32.totalorder %s48, 0
      %p246 = por %p244, %p245
      %s248 = sadd.s32 %s247, 1
      %p251 = scmp.eq.s32.totalorder %s42, 1
      %p252 = scmp.ne.s32.totalorder %s247, %s249
      %p253 = scmp.eq.s32.totalorder %s42, 0
      %p254 = por %p252, %p253
      %p255 = scmp.ne.s32.totalorder %s247, %s249
      %p256 = scmp.eq.s32.totalorder %s47, 1
      %p257 = por %p255, %p256
      %p258 = scmp.ne.s32.totalorder %s249, %s250
      %p259 = scmp.eq.s32.totalorder %s47, 0
      %p260 = por %p258, %p259
      %p261 = scmp.ne.s32.totalorder %s249, %s250
      %p262 = scmp.eq.s32.totalorder %s48, 1
      %p263 = por %p261, %p262
      %p265 = scmp.ne.s32.totalorder %s250, %s264
      %p266 = scmp.eq.s32.totalorder %s48, 0
      %p267 = por %p265, %p266
      %s269 = sadd.s32 %s268, 1
      %p272 = scmp.eq.s32.totalorder %s42, 1
      %p273 = scmp.ne.s32.totalorder %s268, %s270
      %p274 = scmp.eq.s32.totalorder %s42, 0
      %p275 = por %p273, %p274
      %p276 = scmp.ne.s32.totalorder %s268, %s270
      %p277 = scmp.eq.s32.totalorder %s47, 1
      %p278 = por %p276, %p277
      %p279 = scmp.ne.s32.totalorder %s270, %s271
      %p280 = scmp.eq.s32.totalorder %s47, 0
      %p281 = por %p279, %p280
      %p282 = scmp.ne.s32.totalorder %s270, %s271
      %p283 = scmp.eq.s32.totalorder %s48, 1
      %p284 = por %p282, %p283
      %p286 = scmp.ne.s32.totalorder %s271, %s285
      %p287 = scmp.eq.s32.totalorder %s48, 0
      %p288 = por %p286, %p287
      %s290 = sadd.s32 %s289, 1
      %p293 = scmp.eq.s32.totalorder %s42, 1
      %p294 = scmp.ne.s32.totalorder %s289, %s291
      %p295 = scmp.eq.s32.totalorder %s42, 0
      %p296 = por %p294, %p295
      %p297 = scmp.ne.s32.totalorder %s289, %s291
      %p298 = scmp.eq.s32.totalorder %s47, 1
      %p299 = por %p297, %p298
      %p300 = scmp.ne.s32.totalorder %s291, %s292
      %p301 = scmp.eq.s32.totalorder %s47, 0
      %p302 = por %p300, %p301
      %p303 = scmp.ne.s32.totalorder %s291, %s292
      %p304 = scmp.eq.s32.totalorder %s48, 1
      %p305 = por %p303, %p304
      %p307 = scmp.ne.s32.totalorder %s292, %s306
      %p308 = scmp.eq.s32.totalorder %s48, 0
      %p309 = por %p307, %p308
      %s311 = sadd.s32 %s310, 1
      %p314 = scmp.eq.s32.totalorder %s42, 1
      %p315 = scmp.ne.s32.totalorder %s310, %s312
      %p316 = scmp.eq.s32.totalorder %s42, 0
      %p317 = por %p315, %p316
      %p318 = scmp.ne.s32.totalorder %s310, %s312
      %p319 = scmp.eq.s32.totalorder %s47, 1
      %p320 = por %p318, %p319
      %p321 = scmp.ne.s32.totalorder %s312, %s313
      %p322 = scmp.eq.s32.totalorder %s47, 0
      %p323 = por %p321, %p322
      %p324 = scmp.ne.s32.totalorder %s312, %s313
      %p325 = scmp.eq.s32.totalorder %s48, 1
      %p326 = por %p324, %p325
      %p328 = scmp.ne.s32.totalorder %s313, %s327
      %p329 = scmp.eq.s32.totalorder %s48, 0
      %p330 = por %p328, %p329
      %s332 = sadd.s32 %s331, 1
      %p335 = scmp.eq.s32.totalorder %s42, 1
      %p336 = scmp.ne.s32.totalorder %s331, %s333
      %p337 = scmp.eq.s32.totalorder %s42, 0
      %p338 = por %p336, %p337
      %p339 = scmp.ne.s32.totalorder %s331, %s333
      %p340 = scmp.eq.s32.totalorder %s47, 1
      %p341 = por %p339, %p340
      %p342 = scmp.ne.s32.totalorder %s333, %s334
      %p343 = scmp.eq.s32.totalorder %s47, 0
      %p344 = por %p342, %p343
      %p345 = scmp.ne.s32.totalorder %s333, %s334
      %p346 = scmp.eq.s32.totalorder %s48, 1
      %p347 = por %p345, %p346
      %p349 = scmp.ne.s32.totalorder %s334, %s348
      %p350 = scmp.eq.s32.totalorder %s48, 0
      %p351 = por %p349, %p350
      %s353 = sadd.s32 %s352, 1
      %p356 = scmp.eq.s32.totalorder %s42, 1
      %p357 = scmp.ne.s32.totalorder %s352, %s354
      %p358 = scmp.eq.s32.totalorder %s42, 0
      %p359 = por %p357, %p358
      %p360 = scmp.ne.s32.totalorder %s352, %s354
      %p361 = scmp.eq.s32.totalorder %s47, 1
      %p362 = por %p360, %p361
      %p363 = scmp.ne.s32.totalorder %s354, %s355
      %p364 = scmp.eq.s32.totalorder %s47, 0
      %p365 = por %p363, %p364
      %p366 = scmp.ne.s32.totalorder %s354, %s355
      %p367 = scmp.eq.s32.totalorder %s48, 1
      %p368 = por %p366, %p367
      %p370 = scmp.ne.s32.totalorder %s355, %s369
      %p371 = scmp.eq.s32.totalorder %s48, 0
      %p372 = por %p370, %p371
      %s374 = sadd.s32 %s373, 1
      %p377 = scmp.eq.s32.totalorder %s42, 1
      %p378 = scmp.ne.s32.totalorder %s373, %s375
      %p379 = scmp.eq.s32.totalorder %s42, 0
      %p380 = por %p378, %p379
      %p381 = scmp.ne.s32.totalorder %s373, %s375
      %p382 = scmp.eq.s32.totalorder %s47, 1
      %p383 = por %p381, %p382
      %p384 = scmp.ne.s32.totalorder %s375, %s376
      %p385 = scmp.eq.s32.totalorder %s47, 0
      %p386 = por %p384, %p385
      %p387 = scmp.ne.s32.totalorder %s375, %s376
      %p388 = scmp.eq.s32.totalorder %s48, 1
      %p389 = por %p387, %p388
      %p391 = scmp.ne.s32.totalorder %s376, %s390
      %p392 = scmp.eq.s32.totalorder %s48, 0
      %p393 = por %p391, %p392
      %s395 = sadd.s32 %s394, 1
      %p398 = scmp.eq.s32.totalorder %s42, 1
      %p399 = scmp.ne.s32.totalorder %s394, %s396
      %p400 = scmp.eq.s32.totalorder %s42, 0
      %p401 = por %p399, %p400
      %p402 = scmp.ne.s32.totalorder %s394, %s396
      %p403 = scmp.eq.s32.totalorder %s47, 1
      %p404 = por %p402, %p403
      %p405 = scmp.ne.s32.totalorder %s396, %s397
      %p406 = scmp.eq.s32.totalorder %s47, 0
      %p407 = por %p405, %p406
      %p408 = scmp.ne.s32.totalorder %s396, %s397
      %p409 = scmp.eq.s32.totalorder %s48, 1
      %p410 = por %p408, %p409
      %p412 = scmp.ne.s32.totalorder %s397, %s411
      %p413 = scmp.eq.s32.totalorder %s48, 0
      %p414 = por %p412, %p413
      %s416 = sadd.s32 %s415, 1
      %p419 = scmp.eq.s32.totalorder %s42, 1
      %p420 = scmp.ne.s32.totalorder %s415, %s417
      %p421 = scmp.eq.s32.totalorder %s42, 0
      %p422 = por %p420, %p421
      %p423 = scmp.ne.s32.totalorder %s415, %s417
      %p424 = scmp.eq.s32.totalorder %s47, 1
      %p425 = por %p423, %p424
      %p426 = scmp.ne.s32.totalorder %s417, %s418
      %p427 = scmp.eq.s32.totalorder %s47, 0
      %p428 = por %p426, %p427
      %p429 = scmp.ne.s32.totalorder %s417, %s418
      %p430 = scmp.eq.s32.totalorder %s48, 1
      %p431 = por %p429, %p430
      %p433 = scmp.ne.s32.totalorder %s418, %s432
      %p434 = scmp.eq.s32.totalorder %s48, 0
      %p435 = por %p433, %p434
      %s437 = sadd.s32 %s436, 1
      %p440 = scmp.eq.s32.totalorder %s42, 1
      %p441 = scmp.ne.s32.totalorder %s436, %s438
      %p442 = scmp.eq.s32.totalorder %s42, 0
      %p443 = por %p441, %p442
      %p444 = scmp.ne.s32.totalorder %s436, %s438
      %p445 = scmp.eq.s32.totalorder %s47, 1
      %p446 = por %p444, %p445
      %p447 = scmp.ne.s32.totalorder %s438, %s439
      %p448 = scmp.eq.s32.totalorder %s47, 0
      %p449 = por %p447, %p448
      %p450 = scmp.ne.s32.totalorder %s438, %s439
      %p451 = scmp.eq.s32.totalorder %s48, 1
      %p452 = por %p450, %p451
      %p454 = scmp.ne.s32.totalorder %s439, %s453
      %p455 = scmp.eq.s32.totalorder %s48, 0
      %p456 = por %p454, %p455
      %s458 = sadd.s32 %s457, 1
      %p461 = scmp.eq.s32.totalorder %s42, 1
      %p462 = scmp.ne.s32.totalorder %s457, %s459
      %p463 = scmp.eq.s32.totalorder %s42, 0
      %p464 = por %p462, %p463
      %p465 = scmp.ne.s32.totalorder %s457, %s459
      %p466 = scmp.eq.s32.totalorder %s47, 1
      %p467 = por %p465, %p466
      %p468 = scmp.ne.s32.totalorder %s459, %s460
      %p469 = scmp.eq.s32.totalorder %s47, 0
      %p470 = por %p468, %p469
      %p471 = scmp.ne.s32.totalorder %s459, %s460
      %p472 = scmp.eq.s32.totalorder %s48, 1
      %p473 = por %p471, %p472
      %p475 = scmp.ne.s32.totalorder %s460, %s474
      %p476 = scmp.eq.s32.totalorder %s48, 0
      %p477 = por %p475, %p476
      %s478 = ssub.s32 %s49, %s61
      %s479 = ssub.s32 %s50, %s57
      %s480 = sor.u32 %s478, %s479
      %p481 = scmp.eq.s32.totalorder %s480, 0
      %s483 = sadd.s32 %s482, 1
      %s484 = scalar_select %p481, %s482, %s483
      %p487 = pneg %p481
      %p488 = scmp.eq.s32.totalorder %s42, 1
      %p489 = por %p487, %p488
      %p490 = scmp.ne.s32.totalorder %s482, %s485
      %p491 = scmp.eq.s32.totalorder %s42, 0
      %p492 = por %p490, %p491
      %p493 = scmp.ne.s32.totalorder %s482, %s485
      %p494 = scmp.eq.s32.totalorder %s47, 1
      %p495 = por %p493, %p494
      %p496 = scmp.ne.s32.totalorder %s485, %s486
      %p497 = scmp.eq.s32.totalorder %s47, 0
      %p498 = por %p496, %p497
      %p499 = scmp.ne.s32.totalorder %s485, %s486
      %p500 = scmp.eq.s32.totalorder %s48, 1
      %p501 = por %p499, %p500
      %p503 = scmp.ne.s32.totalorder %s486, %s502
      %p504 = scmp.eq.s32.totalorder %s48, 0
      %p505 = por %p503, %p504
      %p506 = scmp.le.s32.totalorder 1, %s42
      %p507 = scmp.lt.s32.totalorder %s42, 3
      %p508 = pnand %p506, %p507
      %p509 = pneg %p508
      // Predicated region
      $region9: #{tpu_custom_call.1} parent=5 // pred_check
        _
      $region10: #{tpu_custom_call.1} parent=5 // pred_check_branch
        %511 = sbr.rel (%p508) target = $region12
      $region11: #{tpu_custom_call.1} parent=5 // pred_region
        %s512 = ssub.s32 %s42, 1
        // Predicated region
        $region13: #{tpu_custom_call.1} parent=11 // pred_check
          %p513 = pneg %p155
        $region14: #{tpu_custom_call.1} parent=11 // pred_check_branch
          %515 = sbr.rel (%p513) target = $region16
        $region15: #{tpu_custom_call.1} parent=11 // pred_region
          %s517 = ssub.s32 256, 256
          %518 = vsyncadd [#allocation9], %s517
          %s519 = sshll.u32 [#allocation8], 4
          %s520 = int_to_ptr.vmem [resolvable:$true] %s519
          %525 = dma.hbm_to_vmem [thread:$0]  %s3, 256, %s520, [#allocation9], 64, 64, 4
        $region16: #{tpu_custom_call.1} parent=11 // pred_fallthru
          _
        // Predicated region
        $region17: #{tpu_custom_call.1} parent=11 // pred_check
          %p526 = pneg %p176
        $region18: #{tpu_custom_call.1} parent=11 // pred_check_branch
          %528 = sbr.rel (%p526) target = $region20
        $region19: #{tpu_custom_call.1} parent=11 // pred_region
          %s530 = ssub.s32 16, 16
          %531 = vsyncadd [#allocation9], %s530
          %s533 = sshll.u32 [#allocation10], 4
          %s534 = int_to_ptr.vmem [resolvable:$true] %s533
          %536 = dma.hbm_to_vmem [thread:$0]  %s4, 16, %s534, [#allocation9]
        $region20: #{tpu_custom_call.1} parent=11 // pred_fallthru
          _
        // Predicated region
        $region21: #{tpu_custom_call.1} parent=11 // pred_check
          %p537 = pneg %p197
        $region22: #{tpu_custom_call.1} parent=11 // pred_check_branch
          %539 = sbr.rel (%p537) target = $region24
        $region23: #{tpu_custom_call.1} parent=11 // pred_region
          %s541 = ssub.s32 256, 256
          %542 = vsyncadd [#allocation12], %s541
          %s543 = sshll.u32 [#allocation11], 4
          %s544 = int_to_ptr.vmem [resolvable:$true] %s543
          %549 = dma.hbm_to_vmem [thread:$0]  %s5, 256, %s544, [#allocation12], 64, 64, 4
        $region24: #{tpu_custom_call.1} parent=11 // pred_fallthru
          _
        // Predicated region
        $region25: #{tpu_custom_call.1} parent=11 // pred_check
          %p550 = pneg %p218
        $region26: #{tpu_custom_call.1} parent=11 // pred_check_branch
          %552 = sbr.rel (%p550) target = $region28
        $region27: #{tpu_custom_call.1} parent=11 // pred_region
          %s554 = ssub.s32 16, 16
          %555 = vsyncadd [#allocation12], %s554
          %s557 = sshll.u32 [#allocation13], 4
          %s558 = int_to_ptr.vmem [resolvable:$true] %s557
          %560 = dma.hbm_to_vmem [thread:$0]  %s6, 16, %s558, [#allocation12]
        $region28: #{tpu_custom_call.1} parent=11 // pred_fallthru
          _
        // Predicated region
        $region29: #{tpu_custom_call.1} parent=11 // pred_check
          %p561 = pneg %p239
        $region30: #{tpu_custom_call.1} parent=11 // pred_check_branch
          %563 = sbr.rel (%p561) target = $region32
        $region31: #{tpu_custom_call.1} parent=11 // pred_region
          %s565 = ssub.s32 256, 256
          %566 = vsyncadd [#allocation15], %s565
          %s567 = sshll.u32 [#allocation14], 4
          %s568 = int_to_ptr.vmem [resolvable:$true] %s567
          %573 = dma.hbm_to_vmem [thread:$0]  %s7, 256, %s568, [#allocation15], 64, 64, 4
        $region32: #{tpu_custom_call.1} parent=11 // pred_fallthru
          _
        // Predicated region
        $region33: #{tpu_custom_call.1} parent=11 // pred_check
          %p574 = pneg %p260
        $region34: #{tpu_custom_call.1} parent=11 // pred_check_branch
          %576 = sbr.rel (%p574) target = $region36
        $region35: #{tpu_custom_call.1} parent=11 // pred_region
          %s578 = ssub.s32 16, 16
          %579 = vsyncadd [#allocation15], %s578
          %s581 = sshll.u32 [#allocation16], 4
          %s582 = int_to_ptr.vmem [resolvable:$true] %s581
          %584 = dma.hbm_to_vmem [thread:$0]  %s8, 16, %s582, [#allocation15]
        $region36: #{tpu_custom_call.1} parent=11 // pred_fallthru
          _
        // Predicated region
        $region37: #{tpu_custom_call.1} parent=11 // pred_check
          %p585 = pneg %p281
        $region38: #{tpu_custom_call.1} parent=11 // pred_check_branch
          %587 = sbr.rel (%p585) target = $region40
        $region39: #{tpu_custom_call.1} parent=11 // pred_region
          %s589 = ssub.s32 256, 256
          %590 = vsyncadd [#allocation18], %s589
          %s591 = sshll.u32 [#allocation17], 4
          %s592 = int_to_ptr.vmem [resolvable:$true] %s591
          %597 = dma.hbm_to_vmem [thread:$0]  %s9, 256, %s592, [#allocation18], 64, 64, 4
        $region40: #{tpu_custom_call.1} parent=11 // pred_fallthru
          _
        // Predicated region
        $region41: #{tpu_custom_call.1} parent=11 // pred_check
          %p598 = pneg %p302
        $region42: #{tpu_custom_call.1} parent=11 // pred_check_branch
          %600 = sbr.rel (%p598) target = $region44
        $region43: #{tpu_custom_call.1} parent=11 // pred_region
          %s602 = ssub.s32 16, 16
          %603 = vsyncadd [#allocation18], %s602
          %s605 = sshll.u32 [#allocation19], 4
          %s606 = int_to_ptr.vmem [resolvable:$true] %s605
          %608 = dma.hbm_to_vmem [thread:$0]  %s10, 16, %s606, [#allocation18]
        $region44: #{tpu_custom_call.1} parent=11 // pred_fallthru
          _
        // Predicated region
        $region45: #{tpu_custom_call.1} parent=11 // pred_check
          %p609 = pneg %p323
        $region46: #{tpu_custom_call.1} parent=11 // pred_check_branch
          %611 = sbr.rel (%p609) target = $region48
        $region47: #{tpu_custom_call.1} parent=11 // pred_region
          %s613 = ssub.s32 16, 16
          %614 = vsyncadd [#allocation21], %s613
          %s616 = sshll.u32 [#allocation20], 4
          %s617 = int_to_ptr.vmem [resolvable:$true] %s616
          %619 = dma.hbm_to_vmem [thread:$0]  %s11, 16, %s617, [#allocation21]
        $region48: #{tpu_custom_call.1} parent=11 // pred_fallthru
          _
        // Predicated region
        $region49: #{tpu_custom_call.1} parent=11 // pred_check
          %p620 = pneg %p344
        $region50: #{tpu_custom_call.1} parent=11 // pred_check_branch
          %622 = sbr.rel (%p620) target = $region52
        $region51: #{tpu_custom_call.1} parent=11 // pred_region
          %s624 = ssub.s32 16, 16
          %625 = vsyncadd [#allocation21], %s624
          %s627 = sshll.u32 [#allocation22], 4
          %s628 = int_to_ptr.vmem [resolvable:$true] %s627
          %630 = dma.hbm_to_vmem [thread:$0]  %s12, 16, %s628, [#allocation21]
        $region52: #{tpu_custom_call.1} parent=11 // pred_fallthru
          _
        // Predicated region
        $region53: #{tpu_custom_call.1} parent=11 // pred_check
          %p631 = pneg %p365
        $region54: #{tpu_custom_call.1} parent=11 // pred_check_branch
          %633 = sbr.rel (%p631) target = $region56
        $region55: #{tpu_custom_call.1} parent=11 // pred_region
          %s635 = ssub.s32 256, 256
          %636 = vsyncadd [#allocation24], %s635
          %s637 = sshll.u32 [#allocation23], 4
          %s638 = int_to_ptr.vmem [resolvable:$true] %s637
          %643 = dma.hbm_to_vmem [thread:$0]  %s13, 256, %s638, [#allocation24], 64, 64, 4
        $region56: #{tpu_custom_call.1} parent=11 // pred_fallthru
          _
        // Predicated region
        $region57: #{tpu_custom_call.1} parent=11 // pred_check
          %p644 = pneg %p386
        $region58: #{tpu_custom_call.1} parent=11 // pred_check_branch
          %646 = sbr.rel (%p644) target = $region60
        $region59: #{tpu_custom_call.1} parent=11 // pred_region
          %s648 = ssub.s32 16, 16
          %649 = vsyncadd [#allocation24], %s648
          %s651 = sshll.u32 [#allocation25], 4
          %s652 = int_to_ptr.vmem [resolvable:$true] %s651
          %654 = dma.hbm_to_vmem [thread:$0]  %s14, 16, %s652, [#allocation24]
        $region60: #{tpu_custom_call.1} parent=11 // pred_fallthru
          _
        // Predicated region
        $region61: #{tpu_custom_call.1} parent=11 // pred_check
          %p655 = pneg %p407
        $region62: #{tpu_custom_call.1} parent=11 // pred_check_branch
          %657 = sbr.rel (%p655) target = $region64
        $region63: #{tpu_custom_call.1} parent=11 // pred_region
          %s659 = ssub.s32 512, 512
          %660 = vsyncadd [#allocation27], %s659
          %s661 = sshll.u32 [#allocation26], 4
          %s662 = int_to_ptr.vmem [resolvable:$true] %s661
          %667 = dma.hbm_to_vmem [thread:$0]  %s15, 512, %s662, [#allocation27], 64, 64, 4
        $region64: #{tpu_custom_call.1} parent=11 // pred_fallthru
          _
        // Predicated region
        $region65: #{tpu_custom_call.1} parent=11 // pred_check
          %p668 = pneg %p428
        $region66: #{tpu_custom_call.1} parent=11 // pred_check_branch
          %670 = sbr.rel (%p668) target = $region68
        $region67: #{tpu_custom_call.1} parent=11 // pred_region
          %s672 = ssub.s32 16, 16
          %673 = vsyncadd [#allocation27], %s672
          %s675 = sshll.u32 [#allocation28], 4
          %s676 = int_to_ptr.vmem [resolvable:$true] %s675
          %678 = dma.hbm_to_vmem [thread:$0]  %s16, 16, %s676, [#allocation27]
        $region68: #{tpu_custom_call.1} parent=11 // pred_fallthru
          _
        // Predicated region
        $region69: #{tpu_custom_call.1} parent=11 // pred_check
          %p679 = pneg %p449
        $region70: #{tpu_custom_call.1} parent=11 // pred_check_branch
          %681 = sbr.rel (%p679) target = $region72
        $region71: #{tpu_custom_call.1} parent=11 // pred_region
          %s683 = ssub.s32 16, 16
          %684 = vsyncadd [#allocation30], %s683
          %s686 = sshll.u32 [#allocation29], 4
          %s687 = int_to_ptr.vmem [resolvable:$true] %s686
          %689 = dma.hbm_to_vmem [thread:$0]  %s17, 16, %s687, [#allocation30]
        $region72: #{tpu_custom_call.1} parent=11 // pred_fallthru
          _
        // Predicated region
        $region73: #{tpu_custom_call.1} parent=11 // pred_check
          %p690 = pneg %p470
        $region74: #{tpu_custom_call.1} parent=11 // pred_check_branch
          %692 = sbr.rel (%p690) target = $region76
        $region75: #{tpu_custom_call.1} parent=11 // pred_region
          %s694 = ssub.s32 16, 16
          %695 = vsyncadd [#allocation30], %s694
          %s697 = sshll.u32 [#allocation31], 4
          %s698 = int_to_ptr.vmem [resolvable:$true] %s697
          %700 = dma.hbm_to_vmem [thread:$0]  %s18, 16, %s698, [#allocation30]
        $region76: #{tpu_custom_call.1} parent=11 // pred_fallthru
          _
      $region12: #{tpu_custom_call.1} parent=5 // pred_fallthru
        _
      %p701 = scmp.lt.s32.totalorder %s42, 2
      // Predicated region
      $region77: #{tpu_custom_call.1} parent=5 // pred_check
        %p702 = pneg %p701
      $region78: #{tpu_custom_call.1} parent=5 // pred_check_branch
        %704 = sbr.rel (%p702) target = $region80
      $region79: #{tpu_custom_call.1} parent=5 // pred_region
        // Predicated region
        $region81: #{tpu_custom_call.1} parent=79 // pred_check
          %p705 = pneg %p76
        $region82: #{tpu_custom_call.1} parent=79 // pred_check_branch
          %707 = sbr.rel (%p705) target = $region84
        $region83: #{tpu_custom_call.1} parent=79 // pred_region
          %s708 = sand.u32 %s66, 1
          %s709 = scalar_lea.sflag [#allocation3], %s708
          %s710 = sand.u32 %s66, 1
          %s711 = smul.addr %s710, 8
          %s712 = scalar_lea.vmem [#allocation2], %s711
          %s714 = ssub.s32 128, 128
          %715 = vsyncadd %s709, %s714
          %s716 = sadd.s32 %s50, %s49
          %s717 = smul.addr %s716, 128
          %s718 = scalar_lea.hbm %s0, %s717
          %s720 = sshll.u32 %s712, 4
          %s721 = int_to_ptr.vmem [resolvable:$true] %s720
          %723 = dma.hbm_to_vmem [thread:$0]  %s718, 128, %s721, %s709
        $region84: #{tpu_custom_call.1} parent=79 // pred_fallthru
          _
        // Predicated region
        $region85: #{tpu_custom_call.1} parent=79 // pred_check
          %p724 = pneg %p102
        $region86: #{tpu_custom_call.1} parent=79 // pred_check_branch
          %726 = sbr.rel (%p724) target = $region88
        $region87: #{tpu_custom_call.1} parent=79 // pred_region
          %s727 = sand.u32 %s42, 1
          %s728 = scalar_lea.sflag [#allocation6], %s727
          %s729 = sand.u32 %s92, 1
          %s730 = smul.addr %s729, 8
          %s731 = scalar_lea.vmem [#allocation5], %s730
          %s733 = ssub.s32 128, 128
          %734 = vsyncadd %s728, %s733
          %s735 = smul.addr %s49, 128
          %s736 = scalar_lea.hbm %s1, %s735
          %s738 = sshll.u32 %s731, 4
          %s739 = int_to_ptr.vmem [resolvable:$true] %s738
          %741 = dma.hbm_to_vmem [thread:$0]  %s736, 128, %s739, %s728
        $region88: #{tpu_custom_call.1} parent=79 // pred_fallthru
          _
        // Predicated region
        $region89: #{tpu_custom_call.1} parent=79 // pred_check
          %p742 = pneg %p128
        $region90: #{tpu_custom_call.1} parent=79 // pred_check_branch
          %744 = sbr.rel (%p742) target = $region92
        $region91: #{tpu_custom_call.1} parent=79 // pred_region
          %s745 = sand.u32 %s42, 1
          %s746 = scalar_lea.sflag [#allocation6], %s745
          %s747 = sand.u32 %s118, 1
          %s748 = scalar_lea.vmem [#allocation7], %s747
          %s750 = ssub.s32 16, 16
          %751 = vsyncadd %s746, %s750
          %s752 = smul.addr %s49, 16
          %s753 = scalar_lea.hbm %s2, %s752
          %s755 = sshll.u32 %s748, 4
          %s756 = int_to_ptr.vmem [resolvable:$true] %s755
          %758 = dma.hbm_to_vmem [thread:$0]  %s753, 16, %s756, %s746
        $region92: #{tpu_custom_call.1} parent=79 // pred_fallthru
          _
      $region80: #{tpu_custom_call.1} parent=5 // pred_fallthru
        _
      %p759 = scmp.le.s32.totalorder 1, %s42
      %p760 = scmp.lt.s32.totalorder %s42, 3
      %p761 = pnand %p759, %p760
      %p762 = pneg %p761
      // Predicated region
      $region93: #{tpu_custom_call.1} parent=5 // pred_check
        _
      $region94: #{tpu_custom_call.1} parent=5 // pred_check_branch
        %764 = sbr.rel (%p761) target = $region96
      $region95: #{tpu_custom_call.1} parent=5 // pred_region
        %s765 = ssub.s32 %s42, 1
        %s766 = sand.u32 %s69, 1
        %s767 = scalar_lea.sflag [#allocation3], %s766
        %s768 = sand.u32 %s69, 1
        %s769 = smul.addr %s768, 8
        %s770 = scalar_lea.vmem [#allocation2], %s769
        // Predicated region
        $region97: #{tpu_custom_call.1} parent=95 // pred_check
          %p771 = pneg %p82
        $region98: #{tpu_custom_call.1} parent=95 // pred_check_branch
          %773 = sbr.rel (%p771) target = $region100
        $region99: #{tpu_custom_call.1} parent=95 // pred_region
          %774 = dma.done %s767, 128
        $region100: #{tpu_custom_call.1} parent=95 // pred_fallthru
          _
        %s775 = sand.u32 %s47, 1
        %s776 = scalar_lea.sflag [#allocation6], %s775
        %s777 = sand.u32 %s95, 1
        %s778 = smul.addr %s777, 8
        %s779 = scalar_lea.vmem [#allocation5], %s778
        // Predicated region
        $region101: #{tpu_custom_call.1} parent=95 // pred_check
          %p780 = pneg %p108
        $region102: #{tpu_custom_call.1} parent=95 // pred_check_branch
          %782 = sbr.rel (%p780) target = $region104
        $region103: #{tpu_custom_call.1} parent=95 // pred_region
          %783 = dma.done %s776, 128
        $region104: #{tpu_custom_call.1} parent=95 // pred_fallthru
          _
        %s784 = sand.u32 %s47, 1
        %s785 = scalar_lea.sflag [#allocation6], %s784
        %s786 = sand.u32 %s121, 1
        %s787 = scalar_lea.vmem [#allocation7], %s786
        // Predicated region
        $region105: #{tpu_custom_call.1} parent=95 // pred_check
          %p788 = pneg %p134
        $region106: #{tpu_custom_call.1} parent=95 // pred_check_branch
          %790 = sbr.rel (%p788) target = $region108
        $region107: #{tpu_custom_call.1} parent=95 // pred_region
          %791 = dma.done %s785, 16
        $region108: #{tpu_custom_call.1} parent=95 // pred_fallthru
          _
        // Predicated region
        $region109: #{tpu_custom_call.1} parent=95 // pred_check
          %p792 = pneg %p155
        $region110: #{tpu_custom_call.1} parent=95 // pred_check_branch
          %794 = sbr.rel (%p792) target = $region112
        $region111: #{tpu_custom_call.1} parent=95 // pred_region
          %795 = dma.done [#allocation9], 256
        $region112: #{tpu_custom_call.1} parent=95 // pred_fallthru
          _
        // Predicated region
        $region113: #{tpu_custom_call.1} parent=95 // pred_check
          %p796 = pneg %p176
        $region114: #{tpu_custom_call.1} parent=95 // pred_check_branch
          %798 = sbr.rel (%p796) target = $region116
        $region115: #{tpu_custom_call.1} parent=95 // pred_region
          %799 = dma.done [#allocation9], 16
        $region116: #{tpu_custom_call.1} parent=95 // pred_fallthru
          _
        // Predicated region
        $region117: #{tpu_custom_call.1} parent=95 // pred_check
          %p800 = pneg %p197
        $region118: #{tpu_custom_call.1} parent=95 // pred_check_branch
          %802 = sbr.rel (%p800) target = $region120
        $region119: #{tpu_custom_call.1} parent=95 // pred_region
          %803 = dma.done [#allocation12], 256
        $region120: #{tpu_custom_call.1} parent=95 // pred_fallthru
          _
        // Predicated region
        $region121: #{tpu_custom_call.1} parent=95 // pred_check
          %p804 = pneg %p218
        $region122: #{tpu_custom_call.1} parent=95 // pred_check_branch
          %806 = sbr.rel (%p804) target = $region124
        $region123: #{tpu_custom_call.1} parent=95 // pred_region
          %807 = dma.done [#allocation12], 16
        $region124: #{tpu_custom_call.1} parent=95 // pred_fallthru
          _
        // Predicated region
        $region125: #{tpu_custom_call.1} parent=95 // pred_check
          %p808 = pneg %p239
        $region126: #{tpu_custom_call.1} parent=95 // pred_check_branch
          %810 = sbr.rel (%p808) target = $region128
        $region127: #{tpu_custom_call.1} parent=95 // pred_region
          %811 = dma.done [#allocation15], 256
        $region128: #{tpu_custom_call.1} parent=95 // pred_fallthru
          _
        // Predicated region
        $region129: #{tpu_custom_call.1} parent=95 // pred_check
          %p812 = pneg %p260
        $region130: #{tpu_custom_call.1} parent=95 // pred_check_branch
          %814 = sbr.rel (%p812) target = $region132
        $region131: #{tpu_custom_call.1} parent=95 // pred_region
          %815 = dma.done [#allocation15], 16
        $region132: #{tpu_custom_call.1} parent=95 // pred_fallthru
          _
        // Predicated region
        $region133: #{tpu_custom_call.1} parent=95 // pred_check
          %p816 = pneg %p281
        $region134: #{tpu_custom_call.1} parent=95 // pred_check_branch
          %818 = sbr.rel (%p816) target = $region136
        $region135: #{tpu_custom_call.1} parent=95 // pred_region
          %819 = dma.done [#allocation18], 256
        $region136: #{tpu_custom_call.1} parent=95 // pred_fallthru
          _
        // Predicated region
        $region137: #{tpu_custom_call.1} parent=95 // pred_check
          %p820 = pneg %p302
        $region138: #{tpu_custom_call.1} parent=95 // pred_check_branch
          %822 = sbr.rel (%p820) target = $region140
        $region139: #{tpu_custom_call.1} parent=95 // pred_region
          %823 = dma.done [#allocation18], 16
        $region140: #{tpu_custom_call.1} parent=95 // pred_fallthru
          _
        // Predicated region
        $region141: #{tpu_custom_call.1} parent=95 // pred_check
          %p824 = pneg %p323
        $region142: #{tpu_custom_call.1} parent=95 // pred_check_branch
          %826 = sbr.rel (%p824) target = $region144
        $region143: #{tpu_custom_call.1} parent=95 // pred_region
          %827 = dma.done [#allocation21], 16
        $region144: #{tpu_custom_call.1} parent=95 // pred_fallthru
          _
        // Predicated region
        $region145: #{tpu_custom_call.1} parent=95 // pred_check
          %p828 = pneg %p344
        $region146: #{tpu_custom_call.1} parent=95 // pred_check_branch
          %830 = sbr.rel (%p828) target = $region148
        $region147: #{tpu_custom_call.1} parent=95 // pred_region
          %831 = dma.done [#allocation21], 16
        $region148: #{tpu_custom_call.1} parent=95 // pred_fallthru
          _
        // Predicated region
        $region149: #{tpu_custom_call.1} parent=95 // pred_check
          %p832 = pneg %p365
        $region150: #{tpu_custom_call.1} parent=95 // pred_check_branch
          %834 = sbr.rel (%p832) target = $region152
        $region151: #{tpu_custom_call.1} parent=95 // pred_region
          %835 = dma.done [#allocation24], 256
        $region152: #{tpu_custom_call.1} parent=95 // pred_fallthru
          _
        // Predicated region
        $region153: #{tpu_custom_call.1} parent=95 // pred_check
          %p836 = pneg %p386
        $region154: #{tpu_custom_call.1} parent=95 // pred_check_branch
          %838 = sbr.rel (%p836) target = $region156
        $region155: #{tpu_custom_call.1} parent=95 // pred_region
          %839 = dma.done [#allocation24], 16
        $region156: #{tpu_custom_call.1} parent=95 // pred_fallthru
          _
        // Predicated region
        $region157: #{tpu_custom_call.1} parent=95 // pred_check
          %p840 = pneg %p407
        $region158: #{tpu_custom_call.1} parent=95 // pred_check_branch
          %842 = sbr.rel (%p840) target = $region160
        $region159: #{tpu_custom_call.1} parent=95 // pred_region
          %843 = dma.done [#allocation27], 512
        $region160: #{tpu_custom_call.1} parent=95 // pred_fallthru
          _
        // Predicated region
        $region161: #{tpu_custom_call.1} parent=95 // pred_check
          %p844 = pneg %p428
        $region162: #{tpu_custom_call.1} parent=95 // pred_check_branch
          %846 = sbr.rel (%p844) target = $region164
        $region163: #{tpu_custom_call.1} parent=95 // pred_region
          %847 = dma.done [#allocation27], 16
        $region164: #{tpu_custom_call.1} parent=95 // pred_fallthru
          _
        // Predicated region
        $region165: #{tpu_custom_call.1} parent=95 // pred_check
          %p848 = pneg %p449
        $region166: #{tpu_custom_call.1} parent=95 // pred_check_branch
          %850 = sbr.rel (%p848) target = $region168
        $region167: #{tpu_custom_call.1} parent=95 // pred_region
          %851 = dma.done [#allocation30], 16
        $region168: #{tpu_custom_call.1} parent=95 // pred_fallthru
          _
        // Predicated region
        $region169: #{tpu_custom_call.1} parent=95 // pred_check
          %p852 = pneg %p470
        $region170: #{tpu_custom_call.1} parent=95 // pred_check_branch
          %854 = sbr.rel (%p852) target = $region172
        $region171: #{tpu_custom_call.1} parent=95 // pred_region
          %855 = dma.done [#allocation30], 16
        $region172: #{tpu_custom_call.1} parent=95 // pred_fallthru
          _
        %s856 = sand.u32 %s69, 1
        %s857 = scalar_lea.sflag [#allocation3], %s856
        %s858 = sand.u32 %s69, 1
        %s859 = smul.addr %s858, 8
        %s860 = scalar_lea.vmem [#allocation2], %s859
        %p861 = pneg %p82
        %p862 = pneg %p79
        %s863 = sand.u32 %s47, 1
        %s864 = scalar_lea.sflag [#allocation6], %s863
        %s865 = sand.u32 %s95, 1
        %s866 = smul.addr %s865, 8
        %s867 = scalar_lea.vmem [#allocation5], %s866
        %p868 = pneg %p108
        %p869 = pneg %p105
        %s870 = sand.u32 %s47, 1
        %s871 = scalar_lea.sflag [#allocation6], %s870
        %s872 = sand.u32 %s121, 1
        %s873 = scalar_lea.vmem [#allocation7], %s872
        %p874 = pneg %p134
        %p875 = pneg %p131
        %p876 = pneg %p155
        %p877 = pneg %p152
        %p878 = pneg %p176
        %p879 = pneg %p173
        %p880 = pneg %p197
        %p881 = pneg %p194
        %p882 = pneg %p218
        %p883 = pneg %p215
        %p884 = pneg %p239
        %p885 = pneg %p236
        %p886 = pneg %p260
        %p887 = pneg %p257
        %p888 = pneg %p281
        %p889 = pneg %p278
        %p890 = pneg %p302
        %p891 = pneg %p299
        %p892 = pneg %p323
        %p893 = pneg %p320
        %p894 = pneg %p344
        %p895 = pneg %p341
        %p896 = pneg %p365
        %p897 = pneg %p362
        %p898 = pneg %p386
        %p899 = pneg %p383
        %p900 = pneg %p407
        %p901 = pneg %p404
        %p902 = pneg %p428
        %p903 = pneg %p425
        %p904 = pneg %p449
        %p905 = pneg %p446
        %p906 = pneg %p470
        %p907 = pneg %p467
        %p908 = pneg %p498
        %p909 = pneg %p495
        %s910 = sand.u32 %s485, 1
        %s911 = scalar_lea.sflag [#allocation4], %s910
        %s912 = sand.u32 %s485, 1
        %s913 = smul.addr %s912, 8
        %s914 = scalar_lea.vmem [#allocation32], %s913
        %v916 = vld [vmem:[%s770] sm:$0xff]
        %v917 = vld [vmem:[%s779] sm:$0xff]
        %v918 = vpack.c.bf16 %v916, %v916
        %v919 = vpack.c.bf16 %v917, %v917
        %v920 = vld [vmem:[#allocation8] sm:$0xf]
        %v921 = vld [vmem:[#allocation8 + $0x4] sm:$0xf]
        %v922 = vld [vmem:[#allocation8 + $0x8] sm:$0xf]
        %v923 = vld [vmem:[#allocation8 + $0xc] sm:$0xf]
        %v924 = vld [vmem:[#allocation10] sm:$0x1]
        %v926 = vlaneseq
        %v927 = vshrl.u32 %v926, 7
        %v928 = vsub.s32 0, %v927
        %v929 = vrot.slane %v924, %v928
        %v935 = vunpack.c.l.b16 %v920
        %v936 = vunpack.c.l.b16 %v921
        %v937 = vunpack.c.l.b16 %v922
        %v938 = vunpack.c.l.b16 %v923
        %v939 = vpack.c.b16 %v936, %v935
        %v940 = vpack.c.b16 %v938, %v937
        %vm943 = vcmask 261120
        %v945 = vsel %vm943, %v918, 0
        %947 = vmatprep.subr.bf16.mxu0 0
        %948 = vmatpush1.bf16.msra.mxu0 %v939
        %949 = vmatprep.subr.bf16.mxu0 0
        %950 = vmatpush1.bf16.msra.mxu0 %v940
        %951 = vmatprep.subr.bf16.mxu0 0
        %952 = vmatpush1.bf16.msra.mxu0 0
        %953 = vmatprep.subr.bf16.mxu0 0
        %954 = vmatpush1.bf16.msra.mxu0 0
        %955 = vmatprep.subr.bf16.mxu0 0
        %956 = vmatpush1.bf16.msra.mxu0 0
        %957 = vmatprep.subr.bf16.mxu0 0
        %958 = vmatpush1.bf16.msra.mxu0 0
        %959 = vmatprep.subr.bf16.mxu0 0
        %960 = vmatpush1.bf16.msra.mxu0 0
        %961 = vmatprep.subr.bf16.mxu0 0
        %962 = vmatpush1.bf16.msra.mxu0 0
        %963 = vmatprep.subr.bf16.mxu0 0
        %964 = vmatpush1.bf16.msra.mxu0 0
        %965 = vmatprep.subr.bf16.mxu0 0
        %966 = vmatpush1.bf16.msra.mxu0 0
        %967 = vmatprep.subr.bf16.mxu0 0
        %968 = vmatpush1.bf16.msra.mxu0 0
        %969 = vmatprep.subr.bf16.mxu0 0
        %970 = vmatpush1.bf16.msra.mxu0 0
        %971 = vmatprep.subr.bf16.mxu0 0
        %972 = vmatpush1.bf16.msra.mxu0 0
        %973 = vmatprep.subr.bf16.mxu0 0
        %974 = vmatpush1.bf16.msra.mxu0 0
        %975 = vmatprep.subr.bf16.mxu0 0
        %976 = vmatpush1.bf16.msra.mxu0 0
        %977 = vmatprep.subr.bf16.mxu0 0
        %978 = vmatpush1.bf16.msra.mxu0 0
        %979 = vmatprep.mubr.bf16.mxu0 0
        %980 = vmatmul.mubr.bf16.gmra.mrb[0].mxu0 %v945
        %v981 = vpop.f32.mrb[0].mxu0
        %v982 = vadd.f32 %v929, %v981
        %v983 = vpop.f32.mrb[0].mxu0
        %v984 = vpop.f32.mrb[0].mxu0
        %v985 = vpop.f32.mrb[0].mxu0
        %986 = vdwg.mxu0
        %v987 = vld [vmem:[#allocation11] sm:$0xf]
        %v988 = vld [vmem:[#allocation11 + $0x4] sm:$0xf]
        %v989 = vld [vmem:[#allocation11 + $0x8] sm:$0xf]
        %v990 = vld [vmem:[#allocation11 + $0xc] sm:$0xf]
        %v991 = vld [vmem:[#allocation13] sm:$0x1]
        %v993 = vlaneseq
        %v994 = vshrl.u32 %v993, 7
        %v995 = vsub.s32 0, %v994
        %v996 = vrot.slane %v991, %v995
        %v1002 = vunpack.c.l.b16 %v987
        %v1003 = vunpack.c.l.b16 %v988
        %v1004 = vunpack.c.l.b16 %v989
        %v1005 = vunpack.c.l.b16 %v990
        %v1006 = vpack.c.b16 %v1003, %v1002
        %v1007 = vpack.c.b16 %v1005, %v1004
        %v1011 = vsel %vm943, %v919, 0
        %1013 = vmatprep.subr.bf16.mxu0 0
        %1014 = vmatpush1.bf16.msra.mxu0 %v1006
        %1015 = vmatprep.subr.bf16.mxu0 0
        %1016 = vmatpush1.bf16.msra.mxu0 %v1007
        %1017 = vmatprep.subr.bf16.mxu0 0
        %1018 = vmatpush1.bf16.msra.mxu0 0
        %1019 = vmatprep.subr.bf16.mxu0 0
        %1020 = vmatpush1.bf16.msra.mxu0 0
        %1021 = vmatprep.subr.bf16.mxu0 0
        %1022 = vmatpush1.bf16.msra.mxu0 0
        %1023 = vmatprep.subr.bf16.mxu0 0
        %1024 = vmatpush1.bf16.msra.mxu0 0
        %1025 = vmatprep.subr.bf16.mxu0 0
        %1026 = vmatpush1.bf16.msra.mxu0 0
        %1027 = vmatprep.subr.bf16.mxu0 0
        %1028 = vmatpush1.bf16.msra.mxu0 0
        %1029 = vmatprep.subr.bf16.mxu0 0
        %1030 = vmatpush1.bf16.msra.mxu0 0
        %1031 = vmatprep.subr.bf16.mxu0 0
        %1032 = vmatpush1.bf16.msra.mxu0 0
        %1033 = vmatprep.subr.bf16.mxu0 0
        %1034 = vmatpush1.bf16.msra.mxu0 0
        %1035 = vmatprep.subr.bf16.mxu0 0
        %1036 = vmatpush1.bf16.msra.mxu0 0
        %1037 = vmatprep.subr.bf16.mxu0 0
        %1038 = vmatpush1.bf16.msra.mxu0 0
        %1039 = vmatprep.subr.bf16.mxu0 0
        %1040 = vmatpush1.bf16.msra.mxu0 0
        %1041 = vmatprep.subr.bf16.mxu0 0
        %1042 = vmatpush1.bf16.msra.mxu0 0
        %1043 = vmatprep.subr.bf16.mxu0 0
        %1044 = vmatpush1.bf16.msra.mxu0 0
        %1045 = vmatprep.mubr.bf16.mxu0 0
        %1046 = vmatmul.mubr.bf16.gmra.mrb[0].mxu0 %v1011
        %v1047 = vpop.f32.mrb[0].mxu0
        %v1048 = vadd.f32 %v996, %v1047
        %v1049 = vpop.f32.mrb[0].mxu0
        %v1050 = vpop.f32.mrb[0].mxu0
        %v1051 = vpop.f32.mrb[0].mxu0
        %1052 = vdwg.mxu0
        %v1053 = vld [vmem:[#allocation14] sm:$0xf]
        %v1054 = vld [vmem:[#allocation14 + $0x4] sm:$0xf]
        %v1055 = vld [vmem:[#allocation14 + $0x8] sm:$0xf]
        %v1056 = vld [vmem:[#allocation14 + $0xc] sm:$0xf]
        %v1057 = vld [vmem:[#allocation16] sm:$0x1]
        %v1059 = vlaneseq
        %v1060 = vshrl.u32 %v1059, 7
        %v1061 = vsub.s32 0, %v1060
        %v1062 = vrot.slane %v1057, %v1061
        %v1068 = vunpack.c.l.b16 %v1053
        %v1069 = vunpack.c.l.b16 %v1054
        %v1070 = vunpack.c.l.b16 %v1055
        %v1071 = vunpack.c.l.b16 %v1056
        %v1072 = vpack.c.b16 %v1069, %v1068
        %v1073 = vpack.c.b16 %v1071, %v1070
        %1076 = vmatprep.subr.bf16.mxu0 0
        %1077 = vmatpush1.bf16.msra.mxu0 %v1072
        %1078 = vmatprep.subr.bf16.mxu0 0
        %1079 = vmatpush1.bf16.msra.mxu0 %v1073
        %1080 = vmatprep.subr.bf16.mxu0 0
        %1081 = vmatpush1.bf16.msra.mxu0 0
        %1082 = vmatprep.subr.bf16.mxu0 0
        %1083 = vmatpush1.bf16.msra.mxu0 0
        %1084 = vmatprep.subr.bf16.mxu0 0
        %1085 = vmatpush1.bf16.msra.mxu0 0
        %1086 = vmatprep.subr.bf16.mxu0 0
        %1087 = vmatpush1.bf16.msra.mxu0 0
        %1088 = vmatprep.subr.bf16.mxu0 0
        %1089 = vmatpush1.bf16.msra.mxu0 0
        %1090 = vmatprep.subr.bf16.mxu0 0
        %1091 = vmatpush1.bf16.msra.mxu0 0
        %1092 = vmatprep.subr.bf16.mxu0 0
        %1093 = vmatpush1.bf16.msra.mxu0 0
        %1094 = vmatprep.subr.bf16.mxu0 0
        %1095 = vmatpush1.bf16.msra.mxu0 0
        %1096 = vmatprep.subr.bf16.mxu0 0
        %1097 = vmatpush1.bf16.msra.mxu0 0
        %1098 = vmatprep.subr.bf16.mxu0 0
        %1099 = vmatpush1.bf16.msra.mxu0 0
        %1100 = vmatprep.subr.bf16.mxu0 0
        %1101 = vmatpush1.bf16.msra.mxu0 0
        %1102 = vmatprep.subr.bf16.mxu0 0
        %1103 = vmatpush1.bf16.msra.mxu0 0
        %1104 = vmatprep.subr.bf16.mxu0 0
        %1105 = vmatpush1.bf16.msra.mxu0 0
        %1106 = vmatprep.subr.bf16.mxu0 0
        %1107 = vmatpush1.bf16.msra.mxu0 0
        %1108 = vmatprep.mubr.bf16.mxu0 0
        %1109 = vmatmul.mubr.bf16.gmra.mrb[0].mxu0 %v1011
        %v1110 = vpop.f32.mrb[0].mxu0
        %v1111 = vadd.f32 %v1062, %v1110
        %v1112 = vpop.f32.mrb[0].mxu0
        %v1113 = vpop.f32.mrb[0].mxu0
        %v1114 = vpop.f32.mrb[0].mxu0
        %1115 = vdwg.mxu0
        %1117 = vrot.lane.b32.xlu0 %v982, 120
        %v1118 = vpop.permute.xlu0 %1117
        %1120 = vrot.lane.b32.xlu0 %v982, 112
        %v1121 = vpop.permute.xlu0 %1120
        %1123 = vrot.lane.b32.xlu0 %v982, 104
        %v1124 = vpop.permute.xlu0 %1123
        %v1126 = vcombine.low %v982, %v1121
        %v1127 = vcombine.high %v982, %v1121
        %v1129 = vunpack.c.l.s4 1983009808
        %v1130 = vunpack.c.0.s8 %v1129
        %v1131 = vlaneseq
        %v1132 = vshrl.u32 %v1131, 7
        %v1133 = vsub.s32 %v1130, %v1132
        %v1134 = vrot.slane %v1126, %v1133
        %v1136 = vunpack.c.l.s4 1983009808
        %v1137 = vunpack.c.0.s8 %v1136
        %v1138 = vlaneseq
        %v1139 = vshrl.u32 %v1138, 7
        %v1140 = vsub.s32 %v1137, %v1139
        %v1141 = vrot.slane %v1127, %v1140
        %v1142 = vcombine.low %v1118, %v1124
        %v1143 = vcombine.high %v1118, %v1124
        %v1145 = vunpack.c.l.s4 1983009808
        %v1146 = vunpack.c.0.s8 %v1145
        %v1147 = vlaneseq
        %v1148 = vshrl.u32 %v1147, 7
        %v1149 = vsub.s32 %v1146, %v1148
        %v1150 = vrot.slane %v1142, %v1149
        %v1152 = vunpack.c.l.s4 1983009808
        %v1153 = vunpack.c.0.s8 %v1152
        %v1154 = vlaneseq
        %v1155 = vshrl.u32 %v1154, 7
        %v1156 = vsub.s32 %v1153, %v1155
        %v1157 = vrot.slane %v1143, %v1156
        %v1158 = vcombine.low %v1134, %v1150
        %v1159 = vcombine.high %v1134, %v1150
        %v1161 = vunpack.c.l.s4 1934713408
        %v1162 = vunpack.c.0.s8 %v1161
        %v1163 = vlaneseq
        %v1164 = vshrl.u32 %v1163, 7
        %v1165 = vsub.s32 %v1162, %v1164
        %v1166 = vrot.slane %v1158, %v1165
        %v1168 = vunpack.c.l.s4 1934713408
        %v1169 = vunpack.c.0.s8 %v1168
        %v1170 = vlaneseq
        %v1171 = vshrl.u32 %v1170, 7
        %v1172 = vsub.s32 %v1169, %v1171
        %v1173 = vrot.slane %v1159, %v1172
        %v1174 = vcombine.low %v1141, %v1157
        %v1175 = vcombine.high %v1141, %v1157
        %v1177 = vunpack.c.l.s4 1934713408
        %v1178 = vunpack.c.0.s8 %v1177
        %v1179 = vlaneseq
        %v1180 = vshrl.u32 %v1179, 7
        %v1181 = vsub.s32 %v1178, %v1180
        %v1182 = vrot.slane %v1174, %v1181
        %v1184 = vunpack.c.l.s4 1934713408
        %v1185 = vunpack.c.0.s8 %v1184
        %v1186 = vlaneseq
        %v1187 = vshrl.u32 %v1186, 7
        %v1188 = vsub.s32 %v1185, %v1187
        %v1189 = vrot.slane %v1175, %v1188
        %v1190 = vcombine.high %v1166, 0.0
        %v1191 = vcombine.high %v1173, 0.0
        %v1192 = vcombine.high %v1182, 0.0
        %v1193 = vcombine.high %v1189, 0.0
        %v1194 = vcombine.low %v1166, %v1173
        %v1196 = vunpack.c.l.s4 1983009808
        %v1197 = vunpack.c.0.s8 %v1196
        %v1198 = vlaneseq
        %v1199 = vshrl.u32 %v1198, 7
        %v1200 = vsub.s32 %v1197, %v1199
        %v1201 = vrot.slane %v1194, %v1200
        %v1202 = vcombine.low %v1190, %v1191
        %v1204 = vunpack.c.l.s4 1983009808
        %v1205 = vunpack.c.0.s8 %v1204
        %v1206 = vlaneseq
        %v1207 = vshrl.u32 %v1206, 7
        %v1208 = vsub.s32 %v1205, %v1207
        %v1209 = vrot.slane %v1202, %v1208
        %v1210 = vcombine.low %v1182, %v1189
        %v1212 = vunpack.c.l.s4 1983009808
        %v1213 = vunpack.c.0.s8 %v1212
        %v1214 = vlaneseq
        %v1215 = vshrl.u32 %v1214, 7
        %v1216 = vsub.s32 %v1213, %v1215
        %v1217 = vrot.slane %v1210, %v1216
        %v1218 = vcombine.low %v1192, %v1193
        %v1220 = vunpack.c.l.s4 1983009808
        %v1221 = vunpack.c.0.s8 %v1220
        %v1222 = vlaneseq
        %v1223 = vshrl.u32 %v1222, 7
        %v1224 = vsub.s32 %v1221, %v1223
        %v1225 = vrot.slane %v1218, %v1224
        %v1226 = vcombine.low %v1201, %v1209
        %v1227 = vcombine.high %v1201, %v1209
        %v1229 = vunpack.c.l.s4 1934713408
        %v1230 = vunpack.c.0.s8 %v1229
        %v1231 = vlaneseq
        %v1232 = vshrl.u32 %v1231, 7
        %v1233 = vsub.s32 %v1230, %v1232
        %v1234 = vrot.slane %v1226, %v1233
        %v1236 = vunpack.c.l.s4 1934713408
        %v1237 = vunpack.c.0.s8 %v1236
        %v1238 = vlaneseq
        %v1239 = vshrl.u32 %v1238, 7
        %v1240 = vsub.s32 %v1237, %v1239
        %v1241 = vrot.slane %v1227, %v1240
        %v1242 = vcombine.low %v1217, %v1225
        %v1243 = vcombine.high %v1217, %v1225
        %v1245 = vunpack.c.l.s4 1934713408
        %v1246 = vunpack.c.0.s8 %v1245
        %v1247 = vlaneseq
        %v1248 = vshrl.u32 %v1247, 7
        %v1249 = vsub.s32 %v1246, %v1248
        %v1250 = vrot.slane %v1242, %v1249
        %v1252 = vunpack.c.l.s4 1934713408
        %v1253 = vunpack.c.0.s8 %v1252
        %v1254 = vlaneseq
        %v1255 = vshrl.u32 %v1254, 7
        %v1256 = vsub.s32 %v1253, %v1255
        %v1257 = vrot.slane %v1243, %v1256
        %v1258 = vcombine.low %v1234, %v1250
        %v1259 = vcombine.high %v1234, %v1250
        %v1260 = vcombine.low %v1241, %v1257
        %v1261 = vcombine.high %v1241, %v1257
        %v1262 = vpack.c.bf16 %v1258, %v1258
        %v1263 = vpack.c.bf16 %v1259, %v1259
        %v1264 = vpack.c.bf16 %v1260, %v1260
        %v1265 = vpack.c.bf16 %v1261, %v1261
        %1267 = vrot.lane.b32.xlu0 %v1048, 120
        %v1268 = vpop.permute.xlu0 %1267
        %1270 = vrot.lane.b32.xlu0 %v1048, 112
        %v1271 = vpop.permute.xlu0 %1270
        %1273 = vrot.lane.b32.xlu0 %v1048, 104
        %v1274 = vpop.permute.xlu0 %1273
        %v1276 = vcombine.low %v1048, %v1271
        %v1277 = vcombine.high %v1048, %v1271
        %v1279 = vunpack.c.l.s4 1983009808
        %v1280 = vunpack.c.0.s8 %v1279
        %v1281 = vlaneseq
        %v1282 = vshrl.u32 %v1281, 7
        %v1283 = vsub.s32 %v1280, %v1282
        %v1284 = vrot.slane %v1276, %v1283
        %v1286 = vunpack.c.l.s4 1983009808
        %v1287 = vunpack.c.0.s8 %v1286
        %v1288 = vlaneseq
        %v1289 = vshrl.u32 %v1288, 7
        %v1290 = vsub.s32 %v1287, %v1289
        %v1291 = vrot.slane %v1277, %v1290
        %v1292 = vcombine.low %v1268, %v1274
        %v1293 = vcombine.high %v1268, %v1274
        %v1295 = vunpack.c.l.s4 1983009808
        %v1296 = vunpack.c.0.s8 %v1295
        %v1297 = vlaneseq
        %v1298 = vshrl.u32 %v1297, 7
        %v1299 = vsub.s32 %v1296, %v1298
        %v1300 = vrot.slane %v1292, %v1299
        %v1302 = vunpack.c.l.s4 1983009808
        %v1303 = vunpack.c.0.s8 %v1302
        %v1304 = vlaneseq
        %v1305 = vshrl.u32 %v1304, 7
        %v1306 = vsub.s32 %v1303, %v1305
        %v1307 = vrot.slane %v1293, %v1306
        %v1308 = vcombine.low %v1284, %v1300
        %v1309 = vcombine.high %v1284, %v1300
        %v1311 = vunpack.c.l.s4 1934713408
        %v1312 = vunpack.c.0.s8 %v1311
        %v1313 = vlaneseq
        %v1314 = vshrl.u32 %v1313, 7
        %v1315 = vsub.s32 %v1312, %v1314
        %v1316 = vrot.slane %v1308, %v1315
        %v1318 = vunpack.c.l.s4 1934713408
        %v1319 = vunpack.c.0.s8 %v1318
        %v1320 = vlaneseq
        %v1321 = vshrl.u32 %v1320, 7
        %v1322 = vsub.s32 %v1319, %v1321
        %v1323 = vrot.slane %v1309, %v1322
        %v1324 = vcombine.low %v1291, %v1307
        %v1325 = vcombine.high %v1291, %v1307
        %v1327 = vunpack.c.l.s4 1934713408
        %v1328 = vunpack.c.0.s8 %v1327
        %v1329 = vlaneseq
        %v1330 = vshrl.u32 %v1329, 7
        %v1331 = vsub.s32 %v1328, %v1330
        %v1332 = vrot.slane %v1324, %v1331
        %v1334 = vunpack.c.l.s4 1934713408
        %v1335 = vunpack.c.0.s8 %v1334
        %v1336 = vlaneseq
        %v1337 = vshrl.u32 %v1336, 7
        %v1338 = vsub.s32 %v1335, %v1337
        %v1339 = vrot.slane %v1325, %v1338
        %v1340 = vcombine.high %v1316, 0.0
        %v1341 = vcombine.high %v1323, 0.0
        %v1342 = vcombine.high %v1332, 0.0
        %v1343 = vcombine.high %v1339, 0.0
        %v1344 = vcombine.low %v1316, %v1323
        %v1346 = vunpack.c.l.s4 1983009808
        %v1347 = vunpack.c.0.s8 %v1346
        %v1348 = vlaneseq
        %v1349 = vshrl.u32 %v1348, 7
        %v1350 = vsub.s32 %v1347, %v1349
        %v1351 = vrot.slane %v1344, %v1350
        %v1352 = vcombine.low %v1340, %v1341
        %v1354 = vunpack.c.l.s4 1983009808
        %v1355 = vunpack.c.0.s8 %v1354
        %v1356 = vlaneseq
        %v1357 = vshrl.u32 %v1356, 7
        %v1358 = vsub.s32 %v1355, %v1357
        %v1359 = vrot.slane %v1352, %v1358
        %v1360 = vcombine.low %v1332, %v1339
        %v1362 = vunpack.c.l.s4 1983009808
        %v1363 = vunpack.c.0.s8 %v1362
        %v1364 = vlaneseq
        %v1365 = vshrl.u32 %v1364, 7
        %v1366 = vsub.s32 %v1363, %v1365
        %v1367 = vrot.slane %v1360, %v1366
        %v1368 = vcombine.low %v1342, %v1343
        %v1370 = vunpack.c.l.s4 1983009808
        %v1371 = vunpack.c.0.s8 %v1370
        %v1372 = vlaneseq
        %v1373 = vshrl.u32 %v1372, 7
        %v1374 = vsub.s32 %v1371, %v1373
        %v1375 = vrot.slane %v1368, %v1374
        %v1376 = vcombine.low %v1351, %v1359
        %v1377 = vcombine.high %v1351, %v1359
        %v1379 = vunpack.c.l.s4 1934713408
        %v1380 = vunpack.c.0.s8 %v1379
        %v1381 = vlaneseq
        %v1382 = vshrl.u32 %v1381, 7
        %v1383 = vsub.s32 %v1380, %v1382
        %v1384 = vrot.slane %v1376, %v1383
        %v1386 = vunpack.c.l.s4 1934713408
        %v1387 = vunpack.c.0.s8 %v1386
        %v1388 = vlaneseq
        %v1389 = vshrl.u32 %v1388, 7
        %v1390 = vsub.s32 %v1387, %v1389
        %v1391 = vrot.slane %v1377, %v1390
        %v1392 = vcombine.low %v1367, %v1375
        %v1393 = vcombine.high %v1367, %v1375
        %v1395 = vunpack.c.l.s4 1934713408
        %v1396 = vunpack.c.0.s8 %v1395
        %v1397 = vlaneseq
        %v1398 = vshrl.u32 %v1397, 7
        %v1399 = vsub.s32 %v1396, %v1398
        %v1400 = vrot.slane %v1392, %v1399
        %v1402 = vunpack.c.l.s4 1934713408
        %v1403 = vunpack.c.0.s8 %v1402
        %v1404 = vlaneseq
        %v1405 = vshrl.u32 %v1404, 7
        %v1406 = vsub.s32 %v1403, %v1405
        %v1407 = vrot.slane %v1393, %v1406
        %v1408 = vcombine.low %v1384, %v1400
        %v1409 = vcombine.high %v1384, %v1400
        %v1410 = vcombine.low %v1391, %v1407
        %v1411 = vcombine.high %v1391, %v1407
        %v1412 = vpack.c.bf16 %v1408, %v1408
        %v1413 = vpack.c.bf16 %v1409, %v1409
        %v1414 = vpack.c.bf16 %v1410, %v1410
        %v1415 = vpack.c.bf16 %v1411, %v1411
        %1417 = vrot.lane.b32.xlu0 %v1111, 120
        %v1418 = vpop.permute.xlu0 %1417
        %1420 = vrot.lane.b32.xlu0 %v1111, 112
        %v1421 = vpop.permute.xlu0 %1420
        %1423 = vrot.lane.b32.xlu0 %v1111, 104
        %v1424 = vpop.permute.xlu0 %1423
        %v1426 = vcombine.low %v1111, %v1421
        %v1427 = vcombine.high %v1111, %v1421
        %v1429 = vunpack.c.l.s4 1983009808
        %v1430 = vunpack.c.0.s8 %v1429
        %v1431 = vlaneseq
        %v1432 = vshrl.u32 %v1431, 7
        %v1433 = vsub.s32 %v1430, %v1432
        %v1434 = vrot.slane %v1426, %v1433
        %v1436 = vunpack.c.l.s4 1983009808
        %v1437 = vunpack.c.0.s8 %v1436
        %v1438 = vlaneseq
        %v1439 = vshrl.u32 %v1438, 7
        %v1440 = vsub.s32 %v1437, %v1439
        %v1441 = vrot.slane %v1427, %v1440
        %v1442 = vcombine.low %v1418, %v1424
        %v1443 = vcombine.high %v1418, %v1424
        %v1445 = vunpack.c.l.s4 1983009808
        %v1446 = vunpack.c.0.s8 %v1445
        %v1447 = vlaneseq
        %v1448 = vshrl.u32 %v1447, 7
        %v1449 = vsub.s32 %v1446, %v1448
        %v1450 = vrot.slane %v1442, %v1449
        %v1452 = vunpack.c.l.s4 1983009808
        %v1453 = vunpack.c.0.s8 %v1452
        %v1454 = vlaneseq
        %v1455 = vshrl.u32 %v1454, 7
        %v1456 = vsub.s32 %v1453, %v1455
        %v1457 = vrot.slane %v1443, %v1456
        %v1458 = vcombine.low %v1434, %v1450
        %v1459 = vcombine.high %v1434, %v1450
        %v1461 = vunpack.c.l.s4 1934713408
        %v1462 = vunpack.c.0.s8 %v1461
        %v1463 = vlaneseq
        %v1464 = vshrl.u32 %v1463, 7
        %v1465 = vsub.s32 %v1462, %v1464
        %v1466 = vrot.slane %v1458, %v1465
        %v1468 = vunpack.c.l.s4 1934713408
        %v1469 = vunpack.c.0.s8 %v1468
        %v1470 = vlaneseq
        %v1471 = vshrl.u32 %v1470, 7
        %v1472 = vsub.s32 %v1469, %v1471
        %v1473 = vrot.slane %v1459, %v1472
        %v1474 = vcombine.low %v1441, %v1457
        %v1475 = vcombine.high %v1441, %v1457
        %v1477 = vunpack.c.l.s4 1934713408
        %v1478 = vunpack.c.0.s8 %v1477
        %v1479 = vlaneseq
        %v1480 = vshrl.u32 %v1479, 7
        %v1481 = vsub.s32 %v1478, %v1480
        %v1482 = vrot.slane %v1474, %v1481
        %v1484 = vunpack.c.l.s4 1934713408
        %v1485 = vunpack.c.0.s8 %v1484
        %v1486 = vlaneseq
        %v1487 = vshrl.u32 %v1486, 7
        %v1488 = vsub.s32 %v1485, %v1487
        %v1489 = vrot.slane %v1475, %v1488
        %v1490 = vcombine.high %v1466, 0.0
        %v1491 = vcombine.high %v1473, 0.0
        %v1492 = vcombine.high %v1482, 0.0
        %v1493 = vcombine.high %v1489, 0.0
        %v1494 = vcombine.low %v1466, %v1473
        %v1496 = vunpack.c.l.s4 1983009808
        %v1497 = vunpack.c.0.s8 %v1496
        %v1498 = vlaneseq
        %v1499 = vshrl.u32 %v1498, 7
        %v1500 = vsub.s32 %v1497, %v1499
        %v1501 = vrot.slane %v1494, %v1500
        %v1502 = vcombine.low %v1490, %v1491
        %v1504 = vunpack.c.l.s4 1983009808
        %v1505 = vunpack.c.0.s8 %v1504
        %v1506 = vlaneseq
        %v1507 = vshrl.u32 %v1506, 7
        %v1508 = vsub.s32 %v1505, %v1507
        %v1509 = vrot.slane %v1502, %v1508
        %v1510 = vcombine.low %v1482, %v1489
        %v1512 = vunpack.c.l.s4 1983009808
        %v1513 = vunpack.c.0.s8 %v1512
        %v1514 = vlaneseq
        %v1515 = vshrl.u32 %v1514, 7
        %v1516 = vsub.s32 %v1513, %v1515
        %v1517 = vrot.slane %v1510, %v1516
        %v1518 = vcombine.low %v1492, %v1493
        %v1520 = vunpack.c.l.s4 1983009808
        %v1521 = vunpack.c.0.s8 %v1520
        %v1522 = vlaneseq
        %v1523 = vshrl.u32 %v1522, 7
        %v1524 = vsub.s32 %v1521, %v1523
        %v1525 = vrot.slane %v1518, %v1524
        %v1526 = vcombine.low %v1501, %v1509
        %v1527 = vcombine.high %v1501, %v1509
        %v1529 = vunpack.c.l.s4 1934713408
        %v1530 = vunpack.c.0.s8 %v1529
        %v1531 = vlaneseq
        %v1532 = vshrl.u32 %v1531, 7
        %v1533 = vsub.s32 %v1530, %v1532
        %v1534 = vrot.slane %v1526, %v1533
        %v1536 = vunpack.c.l.s4 1934713408
        %v1537 = vunpack.c.0.s8 %v1536
        %v1538 = vlaneseq
        %v1539 = vshrl.u32 %v1538, 7
        %v1540 = vsub.s32 %v1537, %v1539
        %v1541 = vrot.slane %v1527, %v1540
        %v1542 = vcombine.low %v1517, %v1525
        %v1543 = vcombine.high %v1517, %v1525
        %v1545 = vunpack.c.l.s4 1934713408
        %v1546 = vunpack.c.0.s8 %v1545
        %v1547 = vlaneseq
        %v1548 = vshrl.u32 %v1547, 7
        %v1549 = vsub.s32 %v1546, %v1548
        %v1550 = vrot.slane %v1542, %v1549
        %v1552 = vunpack.c.l.s4 1934713408
        %v1553 = vunpack.c.0.s8 %v1552
        %v1554 = vlaneseq
        %v1555 = vshrl.u32 %v1554, 7
        %v1556 = vsub.s32 %v1553, %v1555
        %v1557 = vrot.slane %v1543, %v1556
        %v1558 = vcombine.low %v1534, %v1550
        %v1559 = vcombine.high %v1534, %v1550
        %v1560 = vcombine.low %v1541, %v1557
        %v1561 = vcombine.high %v1541, %v1557
        %v1562 = vpack.c.bf16 %v1558, %v1558
        %v1563 = vpack.c.bf16 %v1559, %v1559
        %v1564 = vpack.c.bf16 %v1560, %v1560
        %v1565 = vpack.c.bf16 %v1561, %v1561
        %v1566 = vld [vmem:[%s787] sm:$0x1]
        %v1568 = vlaneseq
        %v1569 = vshrl.u32 %v1568, 7
        %v1570 = vsub.s32 0, %v1569
        %v1571 = vrot.slane %v1566, %v1570
        %vm1573 = vcmask 64512
        %v1575 = vsel %vm1573, %v1262, 0
        %v1578 = vsel %vm1573, %v1412, 0
        %1580 = vmatprep.subr.bf16.mxu0 0
        %1581 = vmatpush1.bf16.xpose.msra.mxu0 %v1578
        %1582 = vmatprep.subr.bf16.mxu0 0
        %1583 = vmatpush1.bf16.xpose.msra.mxu0 0
        %1584 = vmatprep.subr.bf16.mxu0 0
        %1585 = vmatpush1.bf16.xpose.msra.mxu0 0
        %1586 = vmatprep.subr.bf16.mxu0 0
        %1587 = vmatpush1.bf16.xpose.msra.mxu0 0
        %1588 = vmatprep.subr.bf16.mxu0 0
        %1589 = vmatpush1.bf16.xpose.msra.mxu0 0
        %1590 = vmatprep.subr.bf16.mxu0 0
        %1591 = vmatpush1.bf16.xpose.msra.mxu0 0
        %1592 = vmatprep.subr.bf16.mxu0 0
        %1593 = vmatpush1.bf16.xpose.msra.mxu0 0
        %1594 = vmatprep.subr.bf16.mxu0 0
        %1595 = vmatpush1.bf16.xpose.msra.mxu0 0
        %1596 = vmatprep.subr.bf16.mxu0 0
        %1597 = vmatpush1.bf16.xpose.msra.mxu0 0
        %1598 = vmatprep.subr.bf16.mxu0 0
        %1599 = vmatpush1.bf16.xpose.msra.mxu0 0
        %1600 = vmatprep.subr.bf16.mxu0 0
        %1601 = vmatpush1.bf16.xpose.msra.mxu0 0
        %1602 = vmatprep.subr.bf16.mxu0 0
        %1603 = vmatpush1.bf16.xpose.msra.mxu0 0
        %1604 = vmatprep.subr.bf16.mxu0 0
        %1605 = vmatpush1.bf16.xpose.msra.mxu0 0
        %1606 = vmatprep.subr.bf16.mxu0 0
        %1607 = vmatpush1.bf16.xpose.msra.mxu0 0
        %1608 = vmatprep.subr.bf16.mxu0 0
        %1609 = vmatpush1.bf16.xpose.msra.mxu0 0
        %1610 = vmatprep.subr.bf16.mxu0 0
        %1611 = vmatpush1.bf16.xpose.msra.mxu0 0
        %1612 = vmatprep.mubr.bf16.mxu0 0
        %1613 = vmatmul.mubr.bf16.gmra.mrb[0].mxu0 %v1575
        %v1614 = vpop.f32.mrb[0].mxu0
        %v1615 = vadd.f32 %v1571, %v1614
        %v1616 = vpop.f32.mrb[0].mxu0
        %v1617 = vpop.f32.mrb[0].mxu0
        %v1618 = vpop.f32.mrb[0].mxu0
        %1619 = vdwg.mxu0
        %v1621 = vsel %vm1573, %v1263, 0
        %v1624 = vsel %vm1573, %v1413, 0
        %1626 = vmatprep.subr.bf16.mxu0 0
        %1627 = vmatpush1.bf16.xpose.msra.mxu0 %v1624
        %1628 = vmatprep.subr.bf16.mxu0 0
        %1629 = vmatpush1.bf16.xpose.msra.mxu0 0
        %1630 = vmatprep.subr.bf16.mxu0 0
        %1631 = vmatpush1.bf16.xpose.msra.mxu0 0
        %1632 = vmatprep.subr.bf16.mxu0 0
        %1633 = vmatpush1.bf16.xpose.msra.mxu0 0
        %1634 = vmatprep.subr.bf16.mxu0 0
        %1635 = vmatpush1.bf16.xpose.msra.mxu0 0
        %1636 = vmatprep.subr.bf16.mxu0 0
        %1637 = vmatpush1.bf16.xpose.msra.mxu0 0
        %1638 = vmatprep.subr.bf16.mxu0 0
        %1639 = vmatpush1.bf16.xpose.msra.mxu0 0
        %1640 = vmatprep.subr.bf16.mxu0 0
        %1641 = vmatpush1.bf16.xpose.msra.mxu0 0
        %1642 = vmatprep.subr.bf16.mxu0 0
        %1643 = vmatpush1.bf16.xpose.msra.mxu0 0
        %1644 = vmatprep.subr.bf16.mxu0 0
        %1645 = vmatpush1.bf16.xpose.msra.mxu0 0
        %1646 = vmatprep.subr.bf16.mxu0 0
        %1647 = vmatpush1.bf16.xpose.msra.mxu0 0
        %1648 = vmatprep.subr.bf16.mxu0 0
        %1649 = vmatpush1.bf16.xpose.msra.mxu0 0
        %1650 = vmatprep.subr.bf16.mxu0 0
        %1651 = vmatpush1.bf16.xpose.msra.mxu0 0
        %1652 = vmatprep.subr.bf16.mxu0 0
        %1653 = vmatpush1.bf16.xpose.msra.mxu0 0
        %1654 = vmatprep.subr.bf16.mxu0 0
        %1655 = vmatpush1.bf16.xpose.msra.mxu0 0
        %1656 = vmatprep.subr.bf16.mxu0 0
        %1657 = vmatpush1.bf16.xpose.msra.mxu0 0
        %1658 = vmatprep.mubr.bf16.mxu0 0
        %1659 = vmatmul.mubr.bf16.gmra.mrb[0].mxu0 %v1621
        %v1660 = vpop.f32.mrb[0].mxu0
        %v1661 = vadd.f32 %v1571, %v1660
        %v1662 = vpop.f32.mrb[0].mxu0
        %v1663 = vpop.f32.mrb[0].mxu0
        %v1664 = vpop.f32.mrb[0].mxu0
        %1665 = vdwg.mxu0
        %v1667 = vsel %vm1573, %v1264, 0
        %v1670 = vsel %vm1573, %v1414, 0
        %1672 = vmatprep.subr.bf16.mxu0 0
        %1673 = vmatpush1.bf16.xpose.msra.mxu0 %v1670
        %1674 = vmatprep.subr.bf16.mxu0 0
        %1675 = vmatpush1.bf16.xpose.msra.mxu0 0
        %1676 = vmatprep.subr.bf16.mxu0 0
        %1677 = vmatpush1.bf16.xpose.msra.mxu0 0
        %1678 = vmatprep.subr.bf16.mxu0 0
        %1679 = vmatpush1.bf16.xpose.msra.mxu0 0
        %1680 = vmatprep.subr.bf16.mxu0 0
        %1681 = vmatpush1.bf16.xpose.msra.mxu0 0
        %1682 = vmatprep.subr.bf16.mxu0 0
        %1683 = vmatpush1.bf16.xpose.msra.mxu0 0
        %1684 = vmatprep.subr.bf16.mxu0 0
        %1685 = vmatpush1.bf16.xpose.msra.mxu0 0
        %1686 = vmatprep.subr.bf16.mxu0 0
        %1687 = vmatpush1.bf16.xpose.msra.mxu0 0
        %1688 = vmatprep.subr.bf16.mxu0 0
        %1689 = vmatpush1.bf16.xpose.msra.mxu0 0
        %1690 = vmatprep.subr.bf16.mxu0 0
        %1691 = vmatpush1.bf16.xpose.msra.mxu0 0
        %1692 = vmatprep.subr.bf16.mxu0 0
        %1693 = vmatpush1.bf16.xpose.msra.mxu0 0
        %1694 = vmatprep.subr.bf16.mxu0 0
        %1695 = vmatpush1.bf16.xpose.msra.mxu0 0
        %1696 = vmatprep.subr.bf16.mxu0 0
        %1697 = vmatpush1.bf16.xpose.msra.mxu0 0
        %1698 = vmatprep.subr.bf16.mxu0 0
        %1699 = vmatpush1.bf16.xpose.msra.mxu0 0
        %1700 = vmatprep.subr.bf16.mxu0 0
        %1701 = vmatpush1.bf16.xpose.msra.mxu0 0
        %1702 = vmatprep.subr.bf16.mxu0 0
        %1703 = vmatpush1.bf16.xpose.msra.mxu0 0
        %1704 = vmatprep.mubr.bf16.mxu0 0
        %1705 = vmatmul.mubr.bf16.gmra.mrb[0].mxu0 %v1667
        %v1706 = vpop.f32.mrb[0].mxu0
        %v1707 = vadd.f32 %v1571, %v1706
        %v1708 = vpop.f32.mrb[0].mxu0
        %v1709 = vpop.f32.mrb[0].mxu0
        %v1710 = vpop.f32.mrb[0].mxu0
        %1711 = vdwg.mxu0
        %v1713 = vsel %vm1573, %v1265, 0
        %v1716 = vsel %vm1573, %v1415, 0
        %1718 = vmatprep.subr.bf16.mxu0 0
        %1719 = vmatpush1.bf16.xpose.msra.mxu0 %v1716
        %1720 = vmatprep.subr.bf16.mxu0 0
        %1721 = vmatpush1.bf16.xpose.msra.mxu0 0
        %1722 = vmatprep.subr.bf16.mxu0 0
        %1723 = vmatpush1.bf16.xpose.msra.mxu0 0
        %1724 = vmatprep.subr.bf16.mxu0 0
        %1725 = vmatpush1.bf16.xpose.msra.mxu0 0
        %1726 = vmatprep.subr.bf16.mxu0 0
        %1727 = vmatpush1.bf16.xpose.msra.mxu0 0
        %1728 = vmatprep.subr.bf16.mxu0 0
        %1729 = vmatpush1.bf16.xpose.msra.mxu0 0
        %1730 = vmatprep.subr.bf16.mxu0 0
        %1731 = vmatpush1.bf16.xpose.msra.mxu0 0
        %1732 = vmatprep.subr.bf16.mxu0 0
        %1733 = vmatpush1.bf16.xpose.msra.mxu0 0
        %1734 = vmatprep.subr.bf16.mxu0 0
        %1735 = vmatpush1.bf16.xpose.msra.mxu0 0
        %1736 = vmatprep.subr.bf16.mxu0 0
        %1737 = vmatpush1.bf16.xpose.msra.mxu0 0
        %1738 = vmatprep.subr.bf16.mxu0 0
        %1739 = vmatpush1.bf16.xpose.msra.mxu0 0
        %1740 = vmatprep.subr.bf16.mxu0 0
        %1741 = vmatpush1.bf16.xpose.msra.mxu0 0
        %1742 = vmatprep.subr.bf16.mxu0 0
        %1743 = vmatpush1.bf16.xpose.msra.mxu0 0
        %1744 = vmatprep.subr.bf16.mxu0 0
        %1745 = vmatpush1.bf16.xpose.msra.mxu0 0
        %1746 = vmatprep.subr.bf16.mxu0 0
        %1747 = vmatpush1.bf16.xpose.msra.mxu0 0
        %1748 = vmatprep.subr.bf16.mxu0 0
        %1749 = vmatpush1.bf16.xpose.msra.mxu0 0
        %1750 = vmatprep.mubr.bf16.mxu0 0
        %1751 = vmatmul.mubr.bf16.gmra.mrb[0].mxu0 %v1713
        %v1752 = vpop.f32.mrb[0].mxu0
        %v1753 = vadd.f32 %v1571, %v1752
        %v1754 = vpop.f32.mrb[0].mxu0
        %v1755 = vpop.f32.mrb[0].mxu0
        %v1756 = vpop.f32.mrb[0].mxu0
        %1757 = vdwg.mxu0
        %v1758 = vsel %vm1573, %v1615, -inf
        %1759 = vmax.xlane.f32.xlu0 %v1758
        %v1760 = vpop.xlane.xlu0 %1759
        %v1761 = vsel %vm1573, %v1661, -inf
        %1762 = vmax.xlane.f32.xlu0 %v1761
        %v1763 = vpop.xlane.xlu0 %1762
        %v1764 = vsel %vm1573, %v1707, -inf
        %1765 = vmax.xlane.f32.xlu0 %v1764
        %v1766 = vpop.xlane.xlu0 %1765
        %v1767 = vsel %vm1573, %v1753, -inf
        %1768 = vmax.xlane.f32.xlu0 %v1767
        %v1769 = vpop.xlane.xlu0 %1768
        %v1770 = vsub.f32 %v1615, %v1760
        %v1771 = vsub.f32 %v1661, %v1763
        %v1772 = vsub.f32 %v1707, %v1766
        %v1773 = vsub.f32 %v1753, %v1769
        %v1774 = vmul.f32 %v1770, 1.442695
        %v1775 = vpow.pop %v1774
        %v1776 = vmul.f32 %v1771, 1.442695
        %v1777 = vpow.pop %v1776
        %v1778 = vmul.f32 %v1772, 1.442695
        %v1779 = vpow.pop %v1778
        %v1780 = vmul.f32 %v1773, 1.442695
        %v1781 = vpow.pop %v1780
        %v1782 = vsel %vm1573, %v1775, 0.0
        %1783 = vadd.xlane.f32.xlu0 %v1782
        %v1784 = vpop.xlane.xlu0 %1783
        %v1785 = vsel %vm1573, %v1777, 0.0
        %1786 = vadd.xlane.f32.xlu0 %v1785
        %v1787 = vpop.xlane.xlu0 %1786
        %v1788 = vsel %vm1573, %v1779, 0.0
        %1789 = vadd.xlane.f32.xlu0 %v1788
        %v1790 = vpop.xlane.xlu0 %1789
        %v1791 = vsel %vm1573, %v1781, 0.0
        %1792 = vadd.xlane.f32.xlu0 %v1791
        %v1793 = vpop.xlane.xlu0 %1792
        %v1794 = vrcp.pop %v1784
        %v1795 = vrcp.pop %v1787
        %v1796 = vrcp.pop %v1790
        %v1797 = vrcp.pop %v1793
        %v1798 = vmul.f32 %v1775, %v1794
        %v1799 = vmul.f32 %v1777, %v1795
        %v1800 = vmul.f32 %v1779, %v1796
        %v1801 = vmul.f32 %v1781, %v1797
        %v1802 = vpack.c.bf16 %v1798, %v1798
        %v1803 = vpack.c.bf16 %v1799, %v1799
        %v1804 = vpack.c.bf16 %v1800, %v1800
        %v1805 = vpack.c.bf16 %v1801, %v1801
        %v1807 = vsel %vm1573, %v1802, 0
        %vm1809 = vcmask 1043456
        %v1811 = vsel %vm1809, %v1562, 0
        %1813 = vmatprep.subr.bf16.mxu0 0
        %1814 = vmatpush1.bf16.msra.mxu0 %v1811
        %1815 = vmatprep.subr.bf16.mxu0 0
        %1816 = vmatpush1.bf16.msra.mxu0 0
        %1817 = vmatprep.subr.bf16.mxu0 0
        %1818 = vmatpush1.bf16.msra.mxu0 0
        %1819 = vmatprep.subr.bf16.mxu0 0
        %1820 = vmatpush1.bf16.msra.mxu0 0
        %1821 = vmatprep.subr.bf16.mxu0 0
        %1822 = vmatpush1.bf16.msra.mxu0 0
        %1823 = vmatprep.subr.bf16.mxu0 0
        %1824 = vmatpush1.bf16.msra.mxu0 0
        %1825 = vmatprep.subr.bf16.mxu0 0
        %1826 = vmatpush1.bf16.msra.mxu0 0
        %1827 = vmatprep.subr.bf16.mxu0 0
        %1828 = vmatpush1.bf16.msra.mxu0 0
        %1829 = vmatprep.subr.bf16.mxu0 0
        %1830 = vmatpush1.bf16.msra.mxu0 0
        %1831 = vmatprep.subr.bf16.mxu0 0
        %1832 = vmatpush1.bf16.msra.mxu0 0
        %1833 = vmatprep.subr.bf16.mxu0 0
        %1834 = vmatpush1.bf16.msra.mxu0 0
        %1835 = vmatprep.subr.bf16.mxu0 0
        %1836 = vmatpush1.bf16.msra.mxu0 0
        %1837 = vmatprep.subr.bf16.mxu0 0
        %1838 = vmatpush1.bf16.msra.mxu0 0
        %1839 = vmatprep.subr.bf16.mxu0 0
        %1840 = vmatpush1.bf16.msra.mxu0 0
        %1841 = vmatprep.subr.bf16.mxu0 0
        %1842 = vmatpush1.bf16.msra.mxu0 0
        %1843 = vmatprep.subr.bf16.mxu0 0
        %1844 = vmatpush1.bf16.msra.mxu0 0
        %1845 = vmatprep.mubr.bf16.mxu0 0
        %1846 = vmatmul.mubr.bf16.gmra.mrb[0].mxu0 %v1807
        %v1847 = vpop.f32.mrb[0].mxu0
        %v1848 = vadd.f32 0.0, %v1847
        %v1849 = vpop.f32.mrb[0].mxu0
        %v1850 = vpop.f32.mrb[0].mxu0
        %v1851 = vpop.f32.mrb[0].mxu0
        %1852 = vdwg.mxu0
        %v1854 = vsel %vm1573, %v1803, 0
        %v1857 = vsel %vm1809, %v1563, 0
        %1859 = vmatprep.subr.bf16.mxu0 0
        %1860 = vmatpush1.bf16.msra.mxu0 %v1857
        %1861 = vmatprep.subr.bf16.mxu0 0
        %1862 = vmatpush1.bf16.msra.mxu0 0
        %1863 = vmatprep.subr.bf16.mxu0 0
        %1864 = vmatpush1.bf16.msra.mxu0 0
        %1865 = vmatprep.subr.bf16.mxu0 0
        %1866 = vmatpush1.bf16.msra.mxu0 0
        %1867 = vmatprep.subr.bf16.mxu0 0
        %1868 = vmatpush1.bf16.msra.mxu0 0
        %1869 = vmatprep.subr.bf16.mxu0 0
        %1870 = vmatpush1.bf16.msra.mxu0 0
        %1871 = vmatprep.subr.bf16.mxu0 0
        %1872 = vmatpush1.bf16.msra.mxu0 0
        %1873 = vmatprep.subr.bf16.mxu0 0
        %1874 = vmatpush1.bf16.msra.mxu0 0
        %1875 = vmatprep.subr.bf16.mxu0 0
        %1876 = vmatpush1.bf16.msra.mxu0 0
        %1877 = vmatprep.subr.bf16.mxu0 0
        %1878 = vmatpush1.bf16.msra.mxu0 0
        %1879 = vmatprep.subr.bf16.mxu0 0
        %1880 = vmatpush1.bf16.msra.mxu0 0
        %1881 = vmatprep.subr.bf16.mxu0 0
        %1882 = vmatpush1.bf16.msra.mxu0 0
        %1883 = vmatprep.subr.bf16.mxu0 0
        %1884 = vmatpush1.bf16.msra.mxu0 0
        %1885 = vmatprep.subr.bf16.mxu0 0
        %1886 = vmatpush1.bf16.msra.mxu0 0
        %1887 = vmatprep.subr.bf16.mxu0 0
        %1888 = vmatpush1.bf16.msra.mxu0 0
        %1889 = vmatprep.subr.bf16.mxu0 0
        %1890 = vmatpush1.bf16.msra.mxu0 0
        %1891 = vmatprep.mubr.bf16.mxu0 0
        %1892 = vmatmul.mubr.bf16.gmra.mrb[0].mxu0 %v1854
        %v1893 = vpop.f32.mrb[0].mxu0
        %v1894 = vadd.f32 0.0, %v1893
        %v1895 = vpop.f32.mrb[0].mxu0
        %v1896 = vpop.f32.mrb[0].mxu0
        %v1897 = vpop.f32.mrb[0].mxu0
        %1898 = vdwg.mxu0
        %v1900 = vsel %vm1573, %v1804, 0
        %v1903 = vsel %vm1809, %v1564, 0
        %1905 = vmatprep.subr.bf16.mxu0 0
        %1906 = vmatpush1.bf16.msra.mxu0 %v1903
        %1907 = vmatprep.subr.bf16.mxu0 0
        %1908 = vmatpush1.bf16.msra.mxu0 0
        %1909 = vmatprep.subr.bf16.mxu0 0
        %1910 = vmatpush1.bf16.msra.mxu0 0
        %1911 = vmatprep.subr.bf16.mxu0 0
        %1912 = vmatpush1.bf16.msra.mxu0 0
        %1913 = vmatprep.subr.bf16.mxu0 0
        %1914 = vmatpush1.bf16.msra.mxu0 0
        %1915 = vmatprep.subr.bf16.mxu0 0
        %1916 = vmatpush1.bf16.msra.mxu0 0
        %1917 = vmatprep.subr.bf16.mxu0 0
        %1918 = vmatpush1.bf16.msra.mxu0 0
        %1919 = vmatprep.subr.bf16.mxu0 0
        %1920 = vmatpush1.bf16.msra.mxu0 0
        %1921 = vmatprep.subr.bf16.mxu0 0
        %1922 = vmatpush1.bf16.msra.mxu0 0
        %1923 = vmatprep.subr.bf16.mxu0 0
        %1924 = vmatpush1.bf16.msra.mxu0 0
        %1925 = vmatprep.subr.bf16.mxu0 0
        %1926 = vmatpush1.bf16.msra.mxu0 0
        %1927 = vmatprep.subr.bf16.mxu0 0
        %1928 = vmatpush1.bf16.msra.mxu0 0
        %1929 = vmatprep.subr.bf16.mxu0 0
        %1930 = vmatpush1.bf16.msra.mxu0 0
        %1931 = vmatprep.subr.bf16.mxu0 0
        %1932 = vmatpush1.bf16.msra.mxu0 0
        %1933 = vmatprep.subr.bf16.mxu0 0
        %1934 = vmatpush1.bf16.msra.mxu0 0
        %1935 = vmatprep.subr.bf16.mxu0 0
        %1936 = vmatpush1.bf16.msra.mxu0 0
        %1937 = vmatprep.mubr.bf16.mxu0 0
        %1938 = vmatmul.mubr.bf16.gmra.mrb[0].mxu0 %v1900
        %v1939 = vpop.f32.mrb[0].mxu0
        %v1940 = vadd.f32 0.0, %v1939
        %v1941 = vpop.f32.mrb[0].mxu0
        %v1942 = vpop.f32.mrb[0].mxu0
        %v1943 = vpop.f32.mrb[0].mxu0
        %1944 = vdwg.mxu0
        %v1946 = vsel %vm1573, %v1805, 0
        %v1949 = vsel %vm1809, %v1565, 0
        %1951 = vmatprep.subr.bf16.mxu0 0
        %1952 = vmatpush1.bf16.msra.mxu0 %v1949
        %1953 = vmatprep.subr.bf16.mxu0 0
        %1954 = vmatpush1.bf16.msra.mxu0 0
        %1955 = vmatprep.subr.bf16.mxu0 0
        %1956 = vmatpush1.bf16.msra.mxu0 0
        %1957 = vmatprep.subr.bf16.mxu0 0
        %1958 = vmatpush1.bf16.msra.mxu0 0
        %1959 = vmatprep.subr.bf16.mxu0 0
        %1960 = vmatpush1.bf16.msra.mxu0 0
        %1961 = vmatprep.subr.bf16.mxu0 0
        %1962 = vmatpush1.bf16.msra.mxu0 0
        %1963 = vmatprep.subr.bf16.mxu0 0
        %1964 = vmatpush1.bf16.msra.mxu0 0
        %1965 = vmatprep.subr.bf16.mxu0 0
        %1966 = vmatpush1.bf16.msra.mxu0 0
        %1967 = vmatprep.subr.bf16.mxu0 0
        %1968 = vmatpush1.bf16.msra.mxu0 0
        %1969 = vmatprep.subr.bf16.mxu0 0
        %1970 = vmatpush1.bf16.msra.mxu0 0
        %1971 = vmatprep.subr.bf16.mxu0 0
        %1972 = vmatpush1.bf16.msra.mxu0 0
        %1973 = vmatprep.subr.bf16.mxu0 0
        %1974 = vmatpush1.bf16.msra.mxu0 0
        %1975 = vmatprep.subr.bf16.mxu0 0
        %1976 = vmatpush1.bf16.msra.mxu0 0
        %1977 = vmatprep.subr.bf16.mxu0 0
        %1978 = vmatpush1.bf16.msra.mxu0 0
        %1979 = vmatprep.subr.bf16.mxu0 0
        %1980 = vmatpush1.bf16.msra.mxu0 0
        %1981 = vmatprep.subr.bf16.mxu0 0
        %1982 = vmatpush1.bf16.msra.mxu0 0
        %1983 = vmatprep.mubr.bf16.mxu0 0
        %1984 = vmatmul.mubr.bf16.gmra.mrb[0].mxu0 %v1946
        %v1985 = vpop.f32.mrb[0].mxu0
        %v1986 = vadd.f32 0.0, %v1985
        %v1987 = vpop.f32.mrb[0].mxu0
        %v1988 = vpop.f32.mrb[0].mxu0
        %v1989 = vpop.f32.mrb[0].mxu0
        %1990 = vdwg.mxu0
        %v1991 = vcombine.low %v1848, %v1940
        %v1992 = vcombine.high %v1848, %v1940
        %v1994 = vunpack.c.l.s4 1983009808
        %v1995 = vunpack.c.0.s8 %v1994
        %v1996 = vlaneseq
        %v1997 = vshrl.u32 %v1996, 7
        %v1998 = vsub.s32 %v1995, %v1997
        %v1999 = vrot.slane %v1991, %v1998
        %v2001 = vunpack.c.l.s4 1983009808
        %v2002 = vunpack.c.0.s8 %v2001
        %v2003 = vlaneseq
        %v2004 = vshrl.u32 %v2003, 7
        %v2005 = vsub.s32 %v2002, %v2004
        %v2006 = vrot.slane %v1992, %v2005
        %v2007 = vcombine.low %v1894, %v1986
        %v2008 = vcombine.high %v1894, %v1986
        %v2010 = vunpack.c.l.s4 1983009808
        %v2011 = vunpack.c.0.s8 %v2010
        %v2012 = vlaneseq
        %v2013 = vshrl.u32 %v2012, 7
        %v2014 = vsub.s32 %v2011, %v2013
        %v2015 = vrot.slane %v2007, %v2014
        %v2017 = vunpack.c.l.s4 1983009808
        %v2018 = vunpack.c.0.s8 %v2017
        %v2019 = vlaneseq
        %v2020 = vshrl.u32 %v2019, 7
        %v2021 = vsub.s32 %v2018, %v2020
        %v2022 = vrot.slane %v2008, %v2021
        %v2023 = vcombine.low %v1999, %v2015
        %v2024 = vcombine.high %v1999, %v2015
        %v2026 = vunpack.c.l.s4 1934713408
        %v2027 = vunpack.c.0.s8 %v2026
        %v2028 = vlaneseq
        %v2029 = vshrl.u32 %v2028, 7
        %v2030 = vsub.s32 %v2027, %v2029
        %v2031 = vrot.slane %v2023, %v2030
        %v2033 = vunpack.c.l.s4 1934713408
        %v2034 = vunpack.c.0.s8 %v2033
        %v2035 = vlaneseq
        %v2036 = vshrl.u32 %v2035, 7
        %v2037 = vsub.s32 %v2034, %v2036
        %v2038 = vrot.slane %v2024, %v2037
        %v2039 = vcombine.low %v2006, %v2022
        %v2040 = vcombine.high %v2006, %v2022
        %v2042 = vunpack.c.l.s4 1934713408
        %v2043 = vunpack.c.0.s8 %v2042
        %v2044 = vlaneseq
        %v2045 = vshrl.u32 %v2044, 7
        %v2046 = vsub.s32 %v2043, %v2045
        %v2047 = vrot.slane %v2039, %v2046
        %v2049 = vunpack.c.l.s4 1934713408
        %v2050 = vunpack.c.0.s8 %v2049
        %v2051 = vlaneseq
        %v2052 = vshrl.u32 %v2051, 7
        %v2053 = vsub.s32 %v2050, %v2052
        %v2054 = vrot.slane %v2040, %v2053
        %v2055 = vcombine.high %v2031, 0.0
        %v2056 = vcombine.high %v2038, 0.0
        %v2057 = vcombine.high %v2047, 0.0
        %v2058 = vcombine.high %v2054, 0.0
        %v2059 = vcombine.low %v2031, %v2038
        %v2061 = vunpack.c.l.s4 1983009808
        %v2062 = vunpack.c.0.s8 %v2061
        %v2063 = vlaneseq
        %v2064 = vshrl.u32 %v2063, 7
        %v2065 = vsub.s32 %v2062, %v2064
        %v2066 = vrot.slane %v2059, %v2065
        %v2067 = vcombine.low %v2055, %v2056
        %v2069 = vunpack.c.l.s4 1983009808
        %v2070 = vunpack.c.0.s8 %v2069
        %v2071 = vlaneseq
        %v2072 = vshrl.u32 %v2071, 7
        %v2073 = vsub.s32 %v2070, %v2072
        %v2074 = vrot.slane %v2067, %v2073
        %v2075 = vcombine.low %v2047, %v2054
        %v2077 = vunpack.c.l.s4 1983009808
        %v2078 = vunpack.c.0.s8 %v2077
        %v2079 = vlaneseq
        %v2080 = vshrl.u32 %v2079, 7
        %v2081 = vsub.s32 %v2078, %v2080
        %v2082 = vrot.slane %v2075, %v2081
        %v2083 = vcombine.low %v2057, %v2058
        %v2085 = vunpack.c.l.s4 1983009808
        %v2086 = vunpack.c.0.s8 %v2085
        %v2087 = vlaneseq
        %v2088 = vshrl.u32 %v2087, 7
        %v2089 = vsub.s32 %v2086, %v2088
        %v2090 = vrot.slane %v2083, %v2089
        %v2091 = vcombine.low %v2066, %v2074
        %v2092 = vcombine.high %v2066, %v2074
        %v2094 = vunpack.c.l.s4 1934713408
        %v2095 = vunpack.c.0.s8 %v2094
        %v2096 = vlaneseq
        %v2097 = vshrl.u32 %v2096, 7
        %v2098 = vsub.s32 %v2095, %v2097
        %v2099 = vrot.slane %v2091, %v2098
        %v2101 = vunpack.c.l.s4 1934713408
        %v2102 = vunpack.c.0.s8 %v2101
        %v2103 = vlaneseq
        %v2104 = vshrl.u32 %v2103, 7
        %v2105 = vsub.s32 %v2102, %v2104
        %v2106 = vrot.slane %v2092, %v2105
        %v2107 = vcombine.low %v2082, %v2090
        %v2108 = vcombine.high %v2082, %v2090
        %v2110 = vunpack.c.l.s4 1934713408
        %v2111 = vunpack.c.0.s8 %v2110
        %v2112 = vlaneseq
        %v2113 = vshrl.u32 %v2112, 7
        %v2114 = vsub.s32 %v2111, %v2113
        %v2115 = vrot.slane %v2107, %v2114
        %v2117 = vunpack.c.l.s4 1934713408
        %v2118 = vunpack.c.0.s8 %v2117
        %v2119 = vlaneseq
        %v2120 = vshrl.u32 %v2119, 7
        %v2121 = vsub.s32 %v2118, %v2120
        %v2122 = vrot.slane %v2108, %v2121
        %v2123 = vcombine.low %v2099, %v2115
        %v2124 = vcombine.high %v2099, %v2115
        %v2125 = vcombine.low %v2106, %v2122
        %v2126 = vcombine.high %v2106, %v2122
        %2128 = vrot.lane.b32.xlu0 %v2124, 8
        %v2129 = vpop.permute.xlu0 %2128
        %2132 = vrot.lane.b32.xlu0 %v2125, 16
        %v2133 = vpop.permute.xlu0 %2132
        %2136 = vrot.lane.b32.xlu0 %v2126, 24
        %v2137 = vpop.permute.xlu0 %2136
        %v2139 = vsel %vm1573, %v2123, %v2129
        %vm2140 = vcmask 130048
        %v2141 = vsel %vm2140, %v2139, %v2133
        %vm2142 = vcmask 195584
        %v2143 = vsel %vm2142, %v2141, %v2137
        %v2144 = vpack.c.bf16 %v2143, %v2143
        %v2145 = vld [vmem:[#allocation17] sm:$0xf]
        %v2146 = vld [vmem:[#allocation17 + $0x4] sm:$0xf]
        %v2147 = vld [vmem:[#allocation17 + $0x8] sm:$0xf]
        %v2148 = vld [vmem:[#allocation17 + $0xc] sm:$0xf]
        %v2149 = vld [vmem:[#allocation19] sm:$0x1]
        %v2151 = vlaneseq
        %v2152 = vshrl.u32 %v2151, 7
        %v2153 = vsub.s32 0, %v2152
        %v2154 = vrot.slane %v2149, %v2153
        %v2160 = vunpack.c.l.b16 %v2145
        %v2161 = vunpack.c.l.b16 %v2146
        %v2162 = vunpack.c.l.b16 %v2147
        %v2163 = vunpack.c.l.b16 %v2148
        %v2164 = vpack.c.b16 %v2161, %v2160
        %v2165 = vpack.c.b16 %v2163, %v2162
        %v2169 = vsel %vm943, %v2144, 0
        %2171 = vmatprep.subr.bf16.mxu0 0
        %2172 = vmatpush1.bf16.msra.mxu0 %v2164
        %2173 = vmatprep.subr.bf16.mxu0 0
        %2174 = vmatpush1.bf16.msra.mxu0 %v2165
        %2175 = vmatprep.subr.bf16.mxu0 0
        %2176 = vmatpush1.bf16.msra.mxu0 0
        %2177 = vmatprep.subr.bf16.mxu0 0
        %2178 = vmatpush1.bf16.msra.mxu0 0
        %2179 = vmatprep.subr.bf16.mxu0 0
        %2180 = vmatpush1.bf16.msra.mxu0 0
        %2181 = vmatprep.subr.bf16.mxu0 0
        %2182 = vmatpush1.bf16.msra.mxu0 0
        %2183 = vmatprep.subr.bf16.mxu0 0
        %2184 = vmatpush1.bf16.msra.mxu0 0
        %2185 = vmatprep.subr.bf16.mxu0 0
        %2186 = vmatpush1.bf16.msra.mxu0 0
        %2187 = vmatprep.subr.bf16.mxu0 0
        %2188 = vmatpush1.bf16.msra.mxu0 0
        %2189 = vmatprep.subr.bf16.mxu0 0
        %2190 = vmatpush1.bf16.msra.mxu0 0
        %2191 = vmatprep.subr.bf16.mxu0 0
        %2192 = vmatpush1.bf16.msra.mxu0 0
        %2193 = vmatprep.subr.bf16.mxu0 0
        %2194 = vmatpush1.bf16.msra.mxu0 0
        %2195 = vmatprep.subr.bf16.mxu0 0
        %2196 = vmatpush1.bf16.msra.mxu0 0
        %2197 = vmatprep.subr.bf16.mxu0 0
        %2198 = vmatpush1.bf16.msra.mxu0 0
        %2199 = vmatprep.subr.bf16.mxu0 0
        %2200 = vmatpush1.bf16.msra.mxu0 0
        %2201 = vmatprep.subr.bf16.mxu0 0
        %2202 = vmatpush1.bf16.msra.mxu0 0
        %2203 = vmatprep.mubr.bf16.mxu0 0
        %2204 = vmatmul.mubr.bf16.gmra.mrb[0].mxu0 %v2169
        %v2205 = vpop.f32.mrb[0].mxu0
        %v2206 = vadd.f32 %v2154, %v2205
        %v2207 = vpop.f32.mrb[0].mxu0
        %v2208 = vpop.f32.mrb[0].mxu0
        %v2209 = vpop.f32.mrb[0].mxu0
        %2210 = vdwg.mxu0
        %v2211 = vadd.f32 %v916, %v2206
        %v2212 = vld [vmem:[#allocation20] sm:$0x1]
        %v2213 = vld [vmem:[#allocation22] sm:$0x1]
        %v2214 = vsel %vm943, %v2211, 0.0
        %2215 = vadd.xlane.f32.xlu0 %v2214
        %v2216 = vpop.xlane.xlu0 %2215
        %v2217 = vrcp.pop 32.0
        %v2218 = vmul.f32 %v2216, %v2217
        %v2219 = vsub.f32 %v2211, %v2218
        %v2220 = vmul.f32 %v2219, %v2219
        %v2221 = vsel %vm943, %v2220, 0.0
        %2222 = vadd.xlane.f32.xlu0 %v2221
        %v2223 = vpop.xlane.xlu0 %2222
        %v2224 = vmul.f32 %v2223, %v2217
        %v2225 = vadd.f32 %v2224, 1e-05
        %v2226 = vrsqrt.pop %v2225
        %v2227 = vmul.f32 %v2219, %v2226
        %v2229 = vlaneseq
        %v2230 = vshrl.u32 %v2229, 7
        %v2231 = vsub.s32 0, %v2230
        %v2232 = vrot.slane %v2212, %v2231
        %v2234 = vmul.f32 %v2227, %v2232
        %v2236 = vlaneseq
        %v2237 = vshrl.u32 %v2236, 7
        %v2238 = vsub.s32 0, %v2237
        %v2239 = vrot.slane %v2213, %v2238
        %v2241 = vadd.f32 %v2234, %v2239
        %v2242 = vpack.c.bf16 %v2241, %v2241
        %v2243 = vld [vmem:[#allocation23] sm:$0xf]
        %v2244 = vld [vmem:[#allocation23 + $0x4] sm:$0xf]
        %v2245 = vld [vmem:[#allocation23 + $0x8] sm:$0xf]
        %v2246 = vld [vmem:[#allocation23 + $0xc] sm:$0xf]
        %v2247 = vld [vmem:[#allocation25] sm:$0x1]
        %v2249 = vlaneseq
        %v2250 = vshrl.u32 %v2249, 7
        %v2251 = vsub.s32 0, %v2250
        %v2252 = vrot.slane %v2247, %v2251
        %v2258 = vunpack.c.l.b16 %v2243
        %v2259 = vunpack.c.l.b16 %v2244
        %v2260 = vunpack.c.l.b16 %v2245
        %v2261 = vunpack.c.l.b16 %v2246
        %v2262 = vpack.c.b16 %v2259, %v2258
        %v2263 = vpack.c.b16 %v2261, %v2260
        %v2267 = vsel %vm943, %v2242, 0
        %2269 = vmatprep.subr.bf16.mxu0 0
        %2270 = vmatpush1.bf16.msra.mxu0 %v2262
        %2271 = vmatprep.subr.bf16.mxu0 0
        %2272 = vmatpush1.bf16.msra.mxu0 %v2263
        %2273 = vmatprep.subr.bf16.mxu0 0
        %2274 = vmatpush1.bf16.msra.mxu0 0
        %2275 = vmatprep.subr.bf16.mxu0 0
        %2276 = vmatpush1.bf16.msra.mxu0 0
        %2277 = vmatprep.subr.bf16.mxu0 0
        %2278 = vmatpush1.bf16.msra.mxu0 0
        %2279 = vmatprep.subr.bf16.mxu0 0
        %2280 = vmatpush1.bf16.msra.mxu0 0
        %2281 = vmatprep.subr.bf16.mxu0 0
        %2282 = vmatpush1.bf16.msra.mxu0 0
        %2283 = vmatprep.subr.bf16.mxu0 0
        %2284 = vmatpush1.bf16.msra.mxu0 0
        %2285 = vmatprep.subr.bf16.mxu0 0
        %2286 = vmatpush1.bf16.msra.mxu0 0
        %2287 = vmatprep.subr.bf16.mxu0 0
        %2288 = vmatpush1.bf16.msra.mxu0 0
        %2289 = vmatprep.subr.bf16.mxu0 0
        %2290 = vmatpush1.bf16.msra.mxu0 0
        %2291 = vmatprep.subr.bf16.mxu0 0
        %2292 = vmatpush1.bf16.msra.mxu0 0
        %2293 = vmatprep.subr.bf16.mxu0 0
        %2294 = vmatpush1.bf16.msra.mxu0 0
        %2295 = vmatprep.subr.bf16.mxu0 0
        %2296 = vmatpush1.bf16.msra.mxu0 0
        %2297 = vmatprep.subr.bf16.mxu0 0
        %2298 = vmatpush1.bf16.msra.mxu0 0
        %2299 = vmatprep.subr.bf16.mxu0 0
        %2300 = vmatpush1.bf16.msra.mxu0 0
        %2301 = vmatprep.mubr.bf16.mxu0 0
        %2302 = vmatmul.mubr.bf16.gmra.mrb[0].mxu0 %v2267
        %v2303 = vpop.f32.mrb[0].mxu0
        %v2304 = vadd.f32 %v2252, %v2303
        %v2305 = vpop.f32.mrb[0].mxu0
        %v2306 = vpop.f32.mrb[0].mxu0
        %v2307 = vpop.f32.mrb[0].mxu0
        %2308 = vdwg.mxu0
        %v2309 = vmax.f32 %v2304, 0.0
        %v2310 = vpack.c.bf16 %v2309, %v2309
        %v2311 = vld [vmem:[#allocation26] sm:$0xf]
        %v2312 = vld [vmem:[#allocation26 + $0x4] sm:$0xf]
        %v2313 = vld [vmem:[#allocation26 + $0x8] sm:$0xf]
        %v2314 = vld [vmem:[#allocation26 + $0xc] sm:$0xf]
        %v2315 = vld [vmem:[#allocation26 + $0x10] sm:$0xf]
        %v2316 = vld [vmem:[#allocation26 + $0x14] sm:$0xf]
        %v2317 = vld [vmem:[#allocation26 + $0x18] sm:$0xf]
        %v2318 = vld [vmem:[#allocation26 + $0x1c] sm:$0xf]
        %v2319 = vld [vmem:[#allocation28] sm:$0x1]
        %v2321 = vlaneseq
        %v2322 = vshrl.u32 %v2321, 7
        %v2323 = vsub.s32 0, %v2322
        %v2324 = vrot.slane %v2319, %v2323
        %v2334 = vunpack.c.l.b16 %v2311
        %v2335 = vunpack.c.l.b16 %v2312
        %v2336 = vunpack.c.l.b16 %v2313
        %v2337 = vunpack.c.l.b16 %v2314
        %v2338 = vunpack.c.l.b16 %v2315
        %v2339 = vunpack.c.l.b16 %v2316
        %v2340 = vunpack.c.l.b16 %v2317
        %v2341 = vunpack.c.l.b16 %v2318
        %v2342 = vpack.c.b16 %v2335, %v2334
        %v2343 = vpack.c.b16 %v2337, %v2336
        %v2344 = vpack.c.b16 %v2339, %v2338
        %v2345 = vpack.c.b16 %v2341, %v2340
        %vm2350 = vcmask 523264
        %v2352 = vsel %vm2350, %v2310, 0
        %2354 = vmatprep.subr.bf16.mxu0 0
        %2355 = vmatpush1.bf16.msra.mxu0 %v2342
        %2356 = vmatprep.subr.bf16.mxu0 0
        %2357 = vmatpush1.bf16.msra.mxu0 %v2343
        %2358 = vmatprep.subr.bf16.mxu0 0
        %2359 = vmatpush1.bf16.msra.mxu0 %v2344
        %2360 = vmatprep.subr.bf16.mxu0 0
        %2361 = vmatpush1.bf16.msra.mxu0 %v2345
        %2362 = vmatprep.subr.bf16.mxu0 0
        %2363 = vmatpush1.bf16.msra.mxu0 0
        %2364 = vmatprep.subr.bf16.mxu0 0
        %2365 = vmatpush1.bf16.msra.mxu0 0
        %2366 = vmatprep.subr.bf16.mxu0 0
        %2367 = vmatpush1.bf16.msra.mxu0 0
        %2368 = vmatprep.subr.bf16.mxu0 0
        %2369 = vmatpush1.bf16.msra.mxu0 0
        %2370 = vmatprep.subr.bf16.mxu0 0
        %2371 = vmatpush1.bf16.msra.mxu0 0
        %2372 = vmatprep.subr.bf16.mxu0 0
        %2373 = vmatpush1.bf16.msra.mxu0 0
        %2374 = vmatprep.subr.bf16.mxu0 0
        %2375 = vmatpush1.bf16.msra.mxu0 0
        %2376 = vmatprep.subr.bf16.mxu0 0
        %2377 = vmatpush1.bf16.msra.mxu0 0
        %2378 = vmatprep.subr.bf16.mxu0 0
        %2379 = vmatpush1.bf16.msra.mxu0 0
        %2380 = vmatprep.subr.bf16.mxu0 0
        %2381 = vmatpush1.bf16.msra.mxu0 0
        %2382 = vmatprep.subr.bf16.mxu0 0
        %2383 = vmatpush1.bf16.msra.mxu0 0
        %2384 = vmatprep.subr.bf16.mxu0 0
        %2385 = vmatpush1.bf16.msra.mxu0 0
        %2386 = vmatprep.mubr.bf16.mxu0 0
        %2387 = vmatmul.mubr.bf16.gmra.mrb[0].mxu0 %v2352
        %v2388 = vpop.f32.mrb[0].mxu0
        %v2389 = vadd.f32 %v2324, %v2388
        %v2390 = vpop.f32.mrb[0].mxu0
        %v2391 = vpop.f32.mrb[0].mxu0
        %v2392 = vpop.f32.mrb[0].mxu0
        %2393 = vdwg.mxu0
        %v2394 = vadd.f32 %v2241, %v2389
        %v2395 = vld [vmem:[#allocation29] sm:$0x1]
        %v2396 = vld [vmem:[#allocation31] sm:$0x1]
        %v2397 = vsel %vm943, %v2394, 0.0
        %2398 = vadd.xlane.f32.xlu0 %v2397
        %v2399 = vpop.xlane.xlu0 %2398
        %v2400 = vmul.f32 %v2399, %v2217
        %v2401 = vsub.f32 %v2394, %v2400
        %v2402 = vmul.f32 %v2401, %v2401
        %v2403 = vsel %vm943, %v2402, 0.0
        %2404 = vadd.xlane.f32.xlu0 %v2403
        %v2405 = vpop.xlane.xlu0 %2404
        %v2406 = vmul.f32 %v2405, %v2217
        %v2407 = vadd.f32 %v2406, 1e-05
        %v2408 = vrsqrt.pop %v2407
        %v2409 = vmul.f32 %v2401, %v2408
        %v2411 = vlaneseq
        %v2412 = vshrl.u32 %v2411, 7
        %v2413 = vsub.s32 0, %v2412
        %v2414 = vrot.slane %v2395, %v2413
        %v2416 = vmul.f32 %v2409, %v2414
        %v2418 = vlaneseq
        %v2419 = vshrl.u32 %v2418, 7
        %v2420 = vsub.s32 0, %v2419
        %v2421 = vrot.slane %v2396, %v2420
        %v2423 = vadd.f32 %v2416, %v2421
        %2424 = vst.msk [vmem:[%s914] sm:$0xff] %vm943, %v2423
        %s2425 = sand.u32 %s485, 1
        %s2426 = scalar_lea.sflag [#allocation4], %s2425
        %s2427 = sand.u32 %s485, 1
        %s2428 = smul.addr %s2427, 8
        %s2429 = scalar_lea.vmem [#allocation32], %s2428
        // Predicated region
        $region173: #{tpu_custom_call.1} parent=95 // pred_check
          %p2430 = pneg %p495
        $region174: #{tpu_custom_call.1} parent=95 // pred_check_branch
          %2432 = sbr.rel (%p2430) target = $region176
        $region175: #{tpu_custom_call.1} parent=95 // pred_region
          %s2434 = ssub.s32 128, 128
          %2435 = vsyncadd %s2426, %s2434
          %s2436 = sadd.s32 %s52, %s51
          %s2437 = smul.addr %s2436, 128
          %s2438 = scalar_lea.hbm %s19, %s2437
          %s2440 = sshll.u32 %s2429, 4
          %s2441 = int_to_ptr.vmem [resolvable:$true] %s2440
          %2443 = dma.vmem_to_hbm [thread:$0]  %s2441, 128, %s2438, %s2426
        $region176: #{tpu_custom_call.1} parent=95 // pred_fallthru
          _
      $region96: #{tpu_custom_call.1} parent=5 // pred_fallthru
        _
      %p2444 = scmp.le.s32.totalorder 2, %s42
      // Predicated region
      $region177: #{tpu_custom_call.1} parent=5 // pred_check
        %p2445 = pneg %p2444
      $region178: #{tpu_custom_call.1} parent=5 // pred_check_branch
        %2447 = sbr.rel (%p2445) target = $region180
      $region179: #{tpu_custom_call.1} parent=5 // pred_region
        %s2448 = ssub.s32 %s42, 2
        // Predicated region
        $region181: #{tpu_custom_call.1} parent=179 // pred_check
          %p2449 = pneg %p501
        $region182: #{tpu_custom_call.1} parent=179 // pred_check_branch
          %2451 = sbr.rel (%p2449) target = $region184
        $region183: #{tpu_custom_call.1} parent=179 // pred_region
          %s2452 = sand.u32 %s486, 1
          %s2453 = scalar_lea.sflag [#allocation4], %s2452
          %s2454 = sand.u32 %s486, 1
          %s2455 = smul.addr %s2454, 8
          %s2456 = scalar_lea.vmem [#allocation32], %s2455
          %2457 = dma.done %s2453, 128
        $region184: #{tpu_custom_call.1} parent=179 // pred_fallthru
          _
      $region180: #{tpu_custom_call.1} parent=5 // pred_fallthru
        _
    $region6: #{tpu_custom_call.1} parent=1 // loop_footer
      %s46 = sadd.s32 1, %s42
    $region7: #{tpu_custom_call.1} parent=1 // loop_footer_branch
      %41 = sbr.rel target = $region3
    $region8: #{tpu_custom_call.1} parent=1 // loop_exit
      _
    %2458 = vsyncpa [#allocation3], 1
    %s2459 = scalar_lea.sflag [#allocation3], 1
    %2460 = vsyncpa %s2459, 1
    %2461 = vsyncpa [#allocation6], 1
    %s2462 = scalar_lea.sflag [#allocation6], 1
    %2463 = vsyncpa %s2462, 1
    %2464 = vsyncpa [#allocation9], 1
    %2465 = vsyncpa [#allocation12], 1
    %2466 = vsyncpa [#allocation15], 1
    %2467 = vsyncpa [#allocation18], 1
    %2468 = vsyncpa [#allocation21], 1
    %2469 = vsyncpa [#allocation24], 1
    %2470 = vsyncpa [#allocation27], 1
    %2471 = vsyncpa [#allocation30], 1
    %2472 = vsyncpa [#allocation4], 1
    %s2473 = scalar_lea.sflag [#allocation4], 1
    %2474 = vsyncpa %s2473, 1

</llo_original>
